<compile_context>
chip_gen: v5e
topology: v5e:2x2
jax: 0.10.0
libtpu: 0.0.40
codegen_flags: <defaults>
</compile_context>

<pallas_src>
import functools

import jax
import jax.numpy as jnp
from jax import lax
from jax.experimental import pallas as pl
from jax.experimental.pallas import tpu as pltpu


def mea_loss_kernel(s_ref, t_ref, mask_ref, bm_ref, colc_ref, colc2_ref,
                    w1t_ref, w2_ref, out_ref, *,
                    n_batch, temp, alpha, gamma, lam):
    s = s_ref[0].astype(jnp.float32)            # (C, HW)  student features
    t = t_ref[0].astype(jnp.float32)            # (C, HW)  teacher features
    mask_fg = mask_ref[0]                       # (1, HW)  foreground mask (f32)
    C, HW = s.shape
    inv_temp = 1.0 / temp

    def softmax(z, axis):
        m = jnp.max(z, axis=axis, keepdims=True)
        e = jnp.exp(z - m)
        denom = jnp.sum(e, axis=axis, keepdims=True)   # (1,1)
        # denom is a single value: exact 1/denom costs the same as the EUP
        # approx reciprocal here and keeps full accuracy.
        return e * (1.0 / denom)

    # ---- get_attention ----
    def attention(v):                                          # v = |x|, (C, HW)
        fea = jnp.mean(v, axis=0, keepdims=True)               # (1, HW)
        s_att = HW * softmax(fea * inv_temp, axis=1)           # (1, HW)
        ch = jnp.mean(v, axis=1, keepdims=True)                # (C, 1)
        c_att = C * softmax(ch * inv_temp, axis=0)             # (C, 1)
        return s_att, c_att

    s_att_t, c_att_t = attention(jnp.abs(t))
    s_att_s, c_att_s = attention(jnp.abs(s))

    # ---- shared diff between fg and rela losses ----
    diff = s - t
    sq = diff * diff

    # ---- get_fea_loss: sum(sq * (S_t+eps)*(C_t+eps)*(Mask+eps)) ----
    w_sp = (s_att_t + 1e-10) * (mask_fg + 1e-10)               # (1, HW)
    row_fg = jnp.sum(sq * w_sp, axis=1, keepdims=True)         # (C, 1)
    fg = jnp.sum(row_fg * (c_att_t + 1e-10))

    # ---- get_mask_loss ----
    mask_l = (jnp.sum(jnp.abs(c_att_s - c_att_t))
              + jnp.sum(jnp.abs(s_att_s - s_att_t)))

    # ---- get_rela_loss (context terms expanded algebraically) ----
    def spatial_pool(x, i):
        wm_col = colc_ref[i][:, 0:1]                           # (C, 1) conv_mask weight
        # 1xC conv == VPU broadcast-multiply + sublane reduce (no MXU matvec).
        logits = jnp.sum(x * wm_col, axis=0, keepdims=True) + bm_ref[i]   # (1, HW)
        cm = softmax(logits, axis=1)
        return jnp.sum(x * cm, axis=1, keepdims=True)          # (C, 1) context

    def channel_add(ctx, i):
        cc2 = colc2_ref[i]                                     # (3, C2): rows [b1; ln_g; ln_b]
        # conv1 (C -> C2) on a (C,1) context via transposed weight:
        # h[j] = sum_c w1t[c, j] * ctx[c]    -> broadcast-mul + sublane reduce.
        h = jnp.sum(w1t_ref[i] * ctx, axis=0, keepdims=True) + cc2[0:1, :]   # (1, C2)
        mu = jnp.mean(h)                                       # LayerNorm([C2,1,1])
        var = jnp.mean((h - mu) ** 2)
        hn = (h - mu) * lax.rsqrt(var + 1e-5)
        hn = jnp.maximum(hn * cc2[1:2, :] + cc2[2:3, :], 0.0)  # affine + ReLU
        # conv2 (C2 -> C): out[c] = sum_j w2[c, j] * hn[j]  -> lane reduce.
        return (jnp.sum(w2_ref[i] * hn, axis=1, keepdims=True)
                + colc_ref[i][:, 1:2])                         # (C, 1)  + conv2 bias

    delta = (channel_add(spatial_pool(s, 0), 0)
             - channel_add(spatial_pool(t, 1), 1))             # (C, 1)
    row_diff = jnp.sum(diff, axis=1, keepdims=True)            # (C, 1)
    rela = (jnp.sum(sq) + 2.0 * jnp.sum(delta * row_diff)
            + HW * jnp.sum(delta * delta))

    contrib = (alpha * fg + gamma * mask_l + lam * rela) / n_batch
    out_ref[...] = jnp.zeros_like(out_ref) + contrib           # lane-dense splat


def mea_loss_pallas(preds_s, preds_t, mask_fg, params, *,
                    temp=0.5, alpha=0.001, gamma=0.001, lam=5e-06):
    N, C, H, W = preds_s.shape
    HW = H * W
    # Keep the caller's dtype for the big tensors (bf16 halves HBM traffic).
    s = preds_s.reshape(N, C, HW)
    t = preds_t.reshape(N, C, HW)
    m = mask_fg.reshape(N, 1, HW).astype(jnp.float32)
    wm, bm, w1, b1, lng, lnb, w2, b2 = params
    C2 = w1.shape[1]

    # Pack the tiny per-branch params so the pipeline carries few constant inputs:
    #   colc[i]  = [conv_mask weight as a C-column | conv2 bias]        -> (2, C, 2)
    #   colc2[i] = rows [conv1 bias ; LN gamma ; LN beta]               -> (2, 3, C2)
    #   bm_smem  = conv_mask biases (scalars) kept in SMEM              -> (2,)
    #   w1t      = conv1 weight transposed (so conv1 is a sublane reduce) (2, C, C2)
    #   w2f      = conv2 weight as-is (lane reduce)                      (2, C, C2)
    colc = jnp.concatenate(
        [jnp.transpose(wm, (0, 2, 1)), b2], axis=-1).astype(jnp.float32)
    colc2 = jnp.concatenate(
        [jnp.transpose(b1, (0, 2, 1)),
         jnp.transpose(lng, (0, 2, 1)),
         jnp.transpose(lnb, (0, 2, 1))], axis=1).astype(jnp.float32)
    bm_smem = bm.reshape(2).astype(jnp.float32)
    w1t = jnp.transpose(w1, (0, 2, 1)).astype(jnp.float32)
    w2f = w2.astype(jnp.float32)

    kernel = functools.partial(mea_loss_kernel, n_batch=float(N), temp=float(temp),
                               alpha=float(alpha), gamma=float(gamma), lam=float(lam))
    full3 = lambda b: (0, 0, 0)

    itemsize = jnp.dtype(s.dtype).itemsize
    cost = pl.CostEstimate(
        flops=int(20 * N * C * HW),
        transcendentals=int(N * (4 * HW + 2 * C)),
        bytes_accessed=int(N * (2 * C * HW * itemsize + 4 * HW + 4 * 128)
                           + 4 * (2 * (2 * C + 3 * C2 + 2 * C * C2) + 2)),
    )

    # TODO(synk): for very large C*HW (e.g. C=256, HW~16K detection maps on v7x's
    # 64 MiB VMEM) add a second "arbitrary" HW-tile grid axis with a two-pass
    # softmax; at module-scale shapes a single full-HW block fits comfortably.
    out = pl.pallas_call(
        kernel,
        out_shape=jax.ShapeDtypeStruct((N, 1, 128), jnp.float32),
        grid=(N,),
        in_specs=[
            pl.BlockSpec((1, C, HW), lambda b: (b, 0, 0)),      # preds_S
            pl.BlockSpec((1, C, HW), lambda b: (b, 0, 0)),      # preds_T
            pl.BlockSpec((1, 1, HW), lambda b: (b, 0, 0)),      # Mask_fg
            pl.BlockSpec(memory_space=pltpu.MemorySpace.SMEM),  # conv_mask biases (2,)
            pl.BlockSpec((2, C, 2), full3),                     # [wm_col | b2]
            pl.BlockSpec((2, 3, C2), full3),                    # [b1 ; ln_g ; ln_b]
            pl.BlockSpec((2, C, C2), full3),                    # conv1 weight (transposed)
            pl.BlockSpec((2, C, C2), full3),                    # conv2 weight
        ],
        out_specs=pl.BlockSpec((1, 1, 128), lambda b: (b, 0, 0)),
        compiler_params=pltpu.CompilerParams(
            dimension_semantics=("parallel",),
            vmem_limit_bytes=32 * 1024 * 1024),
        cost_estimate=cost,
    )(s, t, m, bm_smem, colc, colc2, w1t, w2f)
    return jnp.sum(out[:, 0, 0])


def make_mask_fg(bboxes, batch_input_shape, H, W):
    """Rasterize gt bboxes into the foreground mask (plain JAX glue).

    bboxes: (N, nb, 4) as (tl_x, tl_y, br_x, br_y) in input-image pixel coords.
    Sequential `maximum` writes over boxes == elementwise max over boxes & 0.
    """
    Hin, Win = batch_input_shape
    x0 = bboxes[..., 0] / Win * W
    y0 = bboxes[..., 1] / Hin * H
    x1 = bboxes[..., 2] / Win * W
    y1 = bboxes[..., 3] / Hin * H
    wmin = jnp.floor(x0).astype(jnp.int32)
    wmax = jnp.ceil(x1).astype(jnp.int32)
    hmin = jnp.floor(y0).astype(jnp.int32)
    hmax = jnp.ceil(y1).astype(jnp.int32)
    area = (1.0 / (hmax + 1 - hmin).astype(jnp.float32)
            / (wmax + 1 - wmin).astype(jnp.float32))            # (N, nb)
    hh = jnp.arange(H)[None, None, :, None]
    ww = jnp.arange(W)[None, None, None, :]
    inbox = ((hh >= hmin[:, :, None, None]) & (hh <= hmax[:, :, None, None]) &
             (ww >= wmin[:, :, None, None]) & (ww <= wmax[:, :, None, None]))
    box_mask = jnp.where(inbox, area[:, :, None, None], 0.0)    # (N, nb, H, W)
    return jnp.max(box_mask, axis=1)                            # (N, H, W)


def mea_loss_ref(preds_s, preds_t, mask_fg, params, *,
                 temp=0.5, alpha=0.001, gamma=0.001, lam=5e-06):
    """Pure-JAX reference mirroring the PyTorch forward (sqrt form, full d_rel)."""
    N, C, H, W = preds_s.shape
    HW = H * W
    s = preds_s.reshape(N, C, HW).astype(jnp.float32)
    t = preds_t.reshape(N, C, HW).astype(jnp.float32)
    m = mask_fg.reshape(N, 1, HW).astype(jnp.float32)
    wm, bm, w1, b1, lng, lnb, w2, b2 = params

    def attention(x):
        v = jnp.abs(x)
        fea = v.mean(axis=1, keepdims=True)
        s_att = HW * jax.nn.softmax(fea / temp, axis=2)
        ch = v.mean(axis=2, keepdims=True)
        c_att = C * jax.nn.softmax(ch / temp, axis=1)
        return s_att, c_att

    s_t, c_t = attention(t)
    s_s, c_s = attention(s)

    w = jnp.sqrt(s_t + 1e-10) * jnp.sqrt(c_t + 1e-10) * jnp.sqrt(m + 1e-10)
    fg = jnp.sum(((s - t) * w) ** 2) / N
    mask_l = jnp.sum(jnp.abs(c_s - c_t)) / N + jnp.sum(jnp.abs(s_s - s_t)) / N

    def spatial_pool(x, i):
        cmask = jnp.einsum('oc,ncl->nol', wm[i], x) + bm[i][None]
        cmask = jax.nn.softmax(cmask, axis=2)
        return jnp.sum(x * cmask, axis=2, keepdims=True)

    def channel_add(ctx, i):
        h = jnp.einsum('oc,ncl->nol', w1[i], ctx) + b1[i][None]
        mu = h.mean(axis=1, keepdims=True)
        var = ((h - mu) ** 2).mean(axis=1, keepdims=True)
        hn = (h - mu) / jnp.sqrt(var + 1e-5)
        hn = jnp.maximum(hn * lng[i][None] + lnb[i][None], 0.0)
        return jnp.einsum('oc,ncl->nol', w2[i], hn) + b2[i][None]

    out_s = s + channel_add(spatial_pool(s, 0), 0)
    out_t = t + channel_add(spatial_pool(t, 1), 1)
    rela = jnp.sum((out_s - out_t) ** 2) / N
    return alpha * fg + gamma * mask_l + lam * rela


if __name__ == "__main__":
    # Small, module-consistent shapes.
    N, C, H, W = 2, 16, 16, 16          # student_channels == teacher_channels == 16
    C2 = C // 2
    nb = 3                               # boxes per image
    batch_input_shape = (64, 64)         # (H_in, W_in)

    key = jax.random.PRNGKey(0)
    ks = jax.random.split(key, 12)

    # bf16 feature maps: the kernel reads HBM in bf16 and upcasts on-chip.
    preds_S = jax.random.normal(ks[0], (N, C, H, W), jnp.bfloat16)
    preds_T = jax.random.normal(ks[1], (N, C, H, W), jnp.bfloat16)

    # Deterministic gt bboxes (tl_x, tl_y, br_x, br_y) in input-image coords.
    bboxes = jnp.array([
        [[4.0, 6.0, 30.0, 28.0], [20.0, 10.0, 50.0, 40.0], [0.0, 0.0, 16.0, 16.0]],
        [[8.0, 8.0, 40.0, 48.0], [32.0, 20.0, 60.0, 60.0], [2.0, 30.0, 20.0, 62.0]],
    ], jnp.float32)

    # Deterministic parameters (shapes from __init__). Last conv weights kept
    # nonzero (the module zero-inits them) so the full compute path is exercised.
    wm = jax.random.normal(ks[2], (2, 1, C), jnp.float32) * 0.1    # conv_mask_{s,t}.weight
    bm = jax.random.normal(ks[3], (2, 1, 1), jnp.float32) * 0.1    # conv_mask_{s,t}.bias
    w1 = jax.random.normal(ks[4], (2, C2, C), jnp.float32) * 0.1   # channel_add conv1 weight
    b1 = jax.random.normal(ks[5], (2, C2, 1), jnp.float32) * 0.1   # channel_add conv1 bias
    lng = 1.0 + 0.1 * jax.random.normal(ks[6], (2, C2, 1), jnp.float32)  # LN gamma
    lnb = 0.1 * jax.random.normal(ks[7], (2, C2, 1), jnp.float32)        # LN beta
    w2 = jax.random.normal(ks[8], (2, C, C2), jnp.float32) * 0.1   # channel_add conv2 weight
    b2 = jax.random.normal(ks[9], (2, C, 1), jnp.float32) * 0.1    # channel_add conv2 bias
    params = (wm, bm, w1, b1, lng, lnb, w2, b2)

    # Glue: rasterize bboxes -> foreground mask (data-dependent scatter, plain JAX).
    mask_fg = make_mask_fg(bboxes, batch_input_shape, H, W)

    loss = mea_loss_pallas(preds_S, preds_T, mask_fg, params)
    loss = jax.block_until_ready(loss)

    loss_ref = jax.block_until_ready(mea_loss_ref(preds_S, preds_T, mask_fg, params))
    assert jnp.isfinite(loss), "kernel produced non-finite loss"
    # Slightly relaxed rtol: the kernel drops the sqrt-then-square round trip,
    # expands the rela MSE algebraically, and uses per-batch partial sums
    # (different reduction order) — all ~1e-4-level relative deviations.
    assert jnp.allclose(loss, loss_ref, rtol=5e-3, atol=1e-6), (loss, loss_ref)

    print("KERNEL_OK")
</pallas_src>

<mosaic_0001>
module attributes {stable_mosaic.version = 11 : i64} {
  func.func @mea_loss_kernel(%arg0: i32, %arg1: memref<1x16x256xbf16, #tpu.memory_space<vmem>>, %arg2: memref<1x16x256xbf16, #tpu.memory_space<vmem>>, %arg3: memref<1x1x256xf32, #tpu.memory_space<vmem>>, %arg4: memref<2xf32, #tpu.memory_space<smem>>, %arg5: memref<2x16x2xf32, #tpu.memory_space<vmem>>, %arg6: memref<2x3x8xf32, #tpu.memory_space<vmem>>, %arg7: memref<2x16x8xf32, #tpu.memory_space<vmem>>, %arg8: memref<2x16x8xf32, #tpu.memory_space<vmem>>, %arg9: memref<1x1x128xf32, #tpu.memory_space<vmem>>) attributes {dimension_semantics = [#tpu.dimension_semantics<parallel>], iteration_bounds = array<i64: 2>, scalar_prefetch = 0 : i64, scratch_operands = 0 : i64, tpu.core_type = #tpu.core_type<tc>, window_params = [{transform_indices = @transform_0, window_bounds = array<i64: 1, 16, 256>}, {transform_indices = @transform_1, window_bounds = array<i64: 1, 16, 256>}, {transform_indices = @transform_2, window_bounds = array<i64: 1, 1, 256>}, {transform_indices = @transform_3, window_bounds = array<i64: 2>}, {pipeline_mode = #tpu.pipeline_mode<synchronous>, transform_indices = @transform_4, window_bounds = array<i64: 2, 16, 2>}, {pipeline_mode = #tpu.pipeline_mode<synchronous>, transform_indices = @transform_5, window_bounds = array<i64: 2, 3, 8>}, {pipeline_mode = #tpu.pipeline_mode<synchronous>, transform_indices = @transform_6, window_bounds = array<i64: 2, 16, 8>}, {pipeline_mode = #tpu.pipeline_mode<synchronous>, transform_indices = @transform_7, window_bounds = array<i64: 2, 16, 8>}, {transform_indices = @transform_8, window_bounds = array<i64: 1, 1, 128>}]} {
    %c0 = arith.constant 0 : index
    %c0_0 = arith.constant 0 : index
    %c0_1 = arith.constant 0 : index
    %0 = vector.load %arg1[%c0, %c0_0, %c0_1] : memref<1x16x256xbf16, #tpu.memory_space<vmem>>, vector<1x16x256xbf16>
    %1 = vector.shape_cast %0 : vector<1x16x256xbf16> to vector<16x256xbf16>
    %2 = arith.extf %1 : vector<16x256xbf16> to vector<16x256xf32>
    %c0_2 = arith.constant 0 : index
    %c0_3 = arith.constant 0 : index
    %c0_4 = arith.constant 0 : index
    %3 = vector.load %arg2[%c0_2, %c0_3, %c0_4] : memref<1x16x256xbf16, #tpu.memory_space<vmem>>, vector<1x16x256xbf16>
    %4 = vector.shape_cast %3 : vector<1x16x256xbf16> to vector<16x256xbf16>
    %5 = arith.extf %4 : vector<16x256xbf16> to vector<16x256xf32>
    %c0_5 = arith.constant 0 : index
    %c0_6 = arith.constant 0 : index
    %c0_7 = arith.constant 0 : index
    %6 = vector.load %arg3[%c0_5, %c0_6, %c0_7] : memref<1x1x256xf32, #tpu.memory_space<vmem>>, vector<1x1x256xf32>
    %7 = vector.shape_cast %6 : vector<1x1x256xf32> to vector<1x256xf32>
    %8 = math.absf %5 : vector<16x256xf32>
    %cst = arith.constant dense<0.000000e+00> : vector<256xf32>
    %9 = vector.multi_reduction <add>, %8, %cst [0] : vector<16x256xf32> to vector<256xf32>
    %10 = vector.shape_cast %9 : vector<256xf32> to vector<1x256xf32>
    %cst_8 = arith.constant 1.600000e+01 : f32
    %11 = vector.broadcast %cst_8 : f32 to vector<1x256xf32>
    %12 = arith.divf %10, %11 : vector<1x256xf32>
    %cst_9 = arith.constant 2.000000e+00 : f32
    %13 = vector.broadcast %cst_9 : f32 to vector<1x256xf32>
    %14 = arith.mulf %12, %13 : vector<1x256xf32>
    %cst_10 = arith.constant dense<0xFF800000> : vector<1xf32>
    %15 = vector.multi_reduction <maximumf>, %14, %cst_10 [1] : vector<1x256xf32> to vector<1xf32>
    %16 = vector.shape_cast %15 : vector<1xf32> to vector<1x1xf32>
    %17 = vector.broadcast %16 : vector<1x1xf32> to vector<1x256xf32>
    %18 = arith.subf %14, %17 : vector<1x256xf32>
    %19 = math.exp %18 : vector<1x256xf32>
    %cst_11 = arith.constant dense<0.000000e+00> : vector<1xf32>
    %20 = vector.multi_reduction <add>, %19, %cst_11 [1] : vector<1x256xf32> to vector<1xf32>
    %21 = vector.shape_cast %20 : vector<1xf32> to vector<1x1xf32>
    %cst_12 = arith.constant 1.000000e+00 : f32
    %22 = vector.broadcast %cst_12 : f32 to vector<1x1xf32>
    %23 = arith.divf %22, %21 : vector<1x1xf32>
    %24 = vector.broadcast %23 : vector<1x1xf32> to vector<1x256xf32>
    %25 = arith.mulf %19, %24 : vector<1x256xf32>
    %cst_13 = arith.constant 2.560000e+02 : f32
    %26 = vector.broadcast %cst_13 : f32 to vector<1x256xf32>
    %27 = arith.mulf %26, %25 : vector<1x256xf32>
    %cst_14 = arith.constant dense<0.000000e+00> : vector<16xf32>
    %28 = vector.multi_reduction <add>, %8, %cst_14 [1] : vector<16x256xf32> to vector<16xf32>
    %29 = vector.shape_cast %28 : vector<16xf32> to vector<16x1xf32>
    %cst_15 = arith.constant 2.560000e+02 : f32
    %30 = vector.broadcast %cst_15 : f32 to vector<16x1xf32>
    %31 = arith.divf %29, %30 : vector<16x1xf32>
    %cst_16 = arith.constant 2.000000e+00 : f32
    %32 = vector.broadcast %cst_16 : f32 to vector<16x1xf32>
    %33 = arith.mulf %31, %32 : vector<16x1xf32>
    %cst_17 = arith.constant dense<0xFF800000> : vector<1xf32>
    %34 = vector.multi_reduction <maximumf>, %33, %cst_17 [0] : vector<16x1xf32> to vector<1xf32>
    %35 = vector.shape_cast %34 : vector<1xf32> to vector<1x1xf32>
    %36 = vector.broadcast %35 : vector<1x1xf32> to vector<16x1xf32>
    %37 = arith.subf %33, %36 : vector<16x1xf32>
    %38 = math.exp %37 : vector<16x1xf32>
    %cst_18 = arith.constant dense<0.000000e+00> : vector<1xf32>
    %39 = vector.multi_reduction <add>, %38, %cst_18 [0] : vector<16x1xf32> to vector<1xf32>
    %40 = vector.shape_cast %39 : vector<1xf32> to vector<1x1xf32>
    %cst_19 = arith.constant 1.000000e+00 : f32
    %41 = vector.broadcast %cst_19 : f32 to vector<1x1xf32>
    %42 = arith.divf %41, %40 : vector<1x1xf32>
    %43 = vector.broadcast %42 : vector<1x1xf32> to vector<16x1xf32>
    %44 = arith.mulf %38, %43 : vector<16x1xf32>
    %cst_20 = arith.constant 1.600000e+01 : f32
    %45 = vector.broadcast %cst_20 : f32 to vector<16x1xf32>
    %46 = arith.mulf %45, %44 : vector<16x1xf32>
    %47 = math.absf %2 : vector<16x256xf32>
    %cst_21 = arith.constant dense<0.000000e+00> : vector<256xf32>
    %48 = vector.multi_reduction <add>, %47, %cst_21 [0] : vector<16x256xf32> to vector<256xf32>
    %49 = vector.shape_cast %48 : vector<256xf32> to vector<1x256xf32>
    %cst_22 = arith.constant 1.600000e+01 : f32
    %50 = vector.broadcast %cst_22 : f32 to vector<1x256xf32>
    %51 = arith.divf %49, %50 : vector<1x256xf32>
    %cst_23 = arith.constant 2.000000e+00 : f32
    %52 = vector.broadcast %cst_23 : f32 to vector<1x256xf32>
    %53 = arith.mulf %51, %52 : vector<1x256xf32>
    %cst_24 = arith.constant dense<0xFF800000> : vector<1xf32>
    %54 = vector.multi_reduction <maximumf>, %53, %cst_24 [1] : vector<1x256xf32> to vector<1xf32>
    %55 = vector.shape_cast %54 : vector<1xf32> to vector<1x1xf32>
    %56 = vector.broadcast %55 : vector<1x1xf32> to vector<1x256xf32>
    %57 = arith.subf %53, %56 : vector<1x256xf32>
    %58 = math.exp %57 : vector<1x256xf32>
    %cst_25 = arith.constant dense<0.000000e+00> : vector<1xf32>
    %59 = vector.multi_reduction <add>, %58, %cst_25 [1] : vector<1x256xf32> to vector<1xf32>
    %60 = vector.shape_cast %59 : vector<1xf32> to vector<1x1xf32>
    %cst_26 = arith.constant 1.000000e+00 : f32
    %61 = vector.broadcast %cst_26 : f32 to vector<1x1xf32>
    %62 = arith.divf %61, %60 : vector<1x1xf32>
    %63 = vector.broadcast %62 : vector<1x1xf32> to vector<1x256xf32>
    %64 = arith.mulf %58, %63 : vector<1x256xf32>
    %cst_27 = arith.constant 2.560000e+02 : f32
    %65 = vector.broadcast %cst_27 : f32 to vector<1x256xf32>
    %66 = arith.mulf %65, %64 : vector<1x256xf32>
    %cst_28 = arith.constant dense<0.000000e+00> : vector<16xf32>
    %67 = vector.multi_reduction <add>, %47, %cst_28 [1] : vector<16x256xf32> to vector<16xf32>
    %68 = vector.shape_cast %67 : vector<16xf32> to vector<16x1xf32>
    %cst_29 = arith.constant 2.560000e+02 : f32
    %69 = vector.broadcast %cst_29 : f32 to vector<16x1xf32>
    %70 = arith.divf %68, %69 : vector<16x1xf32>
    %cst_30 = arith.constant 2.000000e+00 : f32
    %71 = vector.broadcast %cst_30 : f32 to vector<16x1xf32>
    %72 = arith.mulf %70, %71 : vector<16x1xf32>
    %cst_31 = arith.constant dense<0xFF800000> : vector<1xf32>
    %73 = vector.multi_reduction <maximumf>, %72, %cst_31 [0] : vector<16x1xf32> to vector<1xf32>
    %74 = vector.shape_cast %73 : vector<1xf32> to vector<1x1xf32>
    %75 = vector.broadcast %74 : vector<1x1xf32> to vector<16x1xf32>
    %76 = arith.subf %72, %75 : vector<16x1xf32>
    %77 = math.exp %76 : vector<16x1xf32>
    %cst_32 = arith.constant dense<0.000000e+00> : vector<1xf32>
    %78 = vector.multi_reduction <add>, %77, %cst_32 [0] : vector<16x1xf32> to vector<1xf32>
    %79 = vector.shape_cast %78 : vector<1xf32> to vector<1x1xf32>
    %cst_33 = arith.constant 1.000000e+00 : f32
    %80 = vector.broadcast %cst_33 : f32 to vector<1x1xf32>
    %81 = arith.divf %80, %79 : vector<1x1xf32>
    %82 = vector.broadcast %81 : vector<1x1xf32> to vector<16x1xf32>
    %83 = arith.mulf %77, %82 : vector<16x1xf32>
    %cst_34 = arith.constant 1.600000e+01 : f32
    %84 = vector.broadcast %cst_34 : f32 to vector<16x1xf32>
    %85 = arith.mulf %84, %83 : vector<16x1xf32>
    %86 = arith.subf %2, %5 : vector<16x256xf32>
    %87 = arith.mulf %86, %86 : vector<16x256xf32>
    %cst_35 = arith.constant 1.000000e-10 : f32
    %88 = vector.broadcast %cst_35 : f32 to vector<1x256xf32>
    %89 = arith.addf %27, %88 : vector<1x256xf32>
    %cst_36 = arith.constant 1.000000e-10 : f32
    %90 = vector.broadcast %cst_36 : f32 to vector<1x256xf32>
    %91 = arith.addf %7, %90 : vector<1x256xf32>
    %92 = arith.mulf %89, %91 : vector<1x256xf32>
    %93 = vector.broadcast %92 : vector<1x256xf32> to vector<16x256xf32>
    %94 = arith.mulf %87, %93 : vector<16x256xf32>
    %cst_37 = arith.constant dense<0.000000e+00> : vector<16xf32>
    %95 = vector.multi_reduction <add>, %94, %cst_37 [1] : vector<16x256xf32> to vector<16xf32>
    %96 = vector.shape_cast %95 : vector<16xf32> to vector<16x1xf32>
    %cst_38 = arith.constant 1.000000e-10 : f32
    %97 = vector.broadcast %cst_38 : f32 to vector<16x1xf32>
    %98 = arith.addf %46, %97 : vector<16x1xf32>
    %99 = arith.mulf %96, %98 : vector<16x1xf32>
    %100 = vector.shape_cast %99 : vector<16x1xf32> to vector<1x16x1xf32>
    %cst_39 = arith.constant dense<0.000000e+00> : vector<1xf32>
    %101 = vector.multi_reduction <add>, %100, %cst_39 [1, 2] : vector<1x16x1xf32> to vector<1xf32>
    %102 = vector.shape_cast %101 : vector<1xf32> to vector<1x1x1xf32>
    %103 = vector.extract %102[0, 0, 0] : f32 from vector<1x1x1xf32>
    %104 = arith.subf %85, %46 : vector<16x1xf32>
    %105 = math.absf %104 : vector<16x1xf32>
    %106 = vector.shape_cast %105 : vector<16x1xf32> to vector<1x16x1xf32>
    %cst_40 = arith.constant dense<0.000000e+00> : vector<1xf32>
    %107 = vector.multi_reduction <add>, %106, %cst_40 [1, 2] : vector<1x16x1xf32> to vector<1xf32>
    %108 = vector.shape_cast %107 : vector<1xf32> to vector<1x1x1xf32>
    %109 = vector.extract %108[0, 0, 0] : f32 from vector<1x1x1xf32>
    %110 = arith.subf %66, %27 : vector<1x256xf32>
    %111 = math.absf %110 : vector<1x256xf32>
    %112 = vector.shape_cast %111 : vector<1x256xf32> to vector<1x1x256xf32>
    %cst_41 = arith.constant dense<0.000000e+00> : vector<1xf32>
    %113 = vector.multi_reduction <add>, %112, %cst_41 [1, 2] : vector<1x1x256xf32> to vector<1xf32>
    %114 = vector.shape_cast %113 : vector<1xf32> to vector<1x1x1xf32>
    %115 = vector.extract %114[0, 0, 0] : f32 from vector<1x1x1xf32>
    %116 = arith.addf %109, %115 : f32
    %c0_42 = arith.constant 0 : index
    %c0_43 = arith.constant 0 : index
    %c0_44 = arith.constant 0 : index
    %117 = vector.load %arg5[%c0_42, %c0_43, %c0_44] : memref<2x16x2xf32, #tpu.memory_space<vmem>>, vector<1x16x2xf32>
    %118 = vector.shape_cast %117 : vector<1x16x2xf32> to vector<16x2xf32>
    %119 = vector.extract_strided_slice %118 {offsets = [0, 0], sizes = [16, 1], strides = [1, 1]} : vector<16x2xf32> to vector<16x1xf32>
    %120 = vector.broadcast %119 : vector<16x1xf32> to vector<16x256xf32>
    %121 = arith.mulf %2, %120 : vector<16x256xf32>
    %cst_45 = arith.constant dense<0.000000e+00> : vector<256xf32>
    %122 = vector.multi_reduction <add>, %121, %cst_45 [0] : vector<16x256xf32> to vector<256xf32>
    %123 = vector.shape_cast %122 : vector<256xf32> to vector<1x256xf32>
    %c0_46 = arith.constant 0 : index
    %124 = memref.load %arg4[%c0_46] : memref<2xf32, #tpu.memory_space<smem>>
    %125 = vector.broadcast %124 : f32 to vector<1x256xf32>
    %126 = arith.addf %123, %125 : vector<1x256xf32>
    %cst_47 = arith.constant dense<0xFF800000> : vector<1xf32>
    %127 = vector.multi_reduction <maximumf>, %126, %cst_47 [1] : vector<1x256xf32> to vector<1xf32>
    %128 = vector.shape_cast %127 : vector<1xf32> to vector<1x1xf32>
    %129 = vector.broadcast %128 : vector<1x1xf32> to vector<1x256xf32>
    %130 = arith.subf %126, %129 : vector<1x256xf32>
    %131 = math.exp %130 : vector<1x256xf32>
    %cst_48 = arith.constant dense<0.000000e+00> : vector<1xf32>
    %132 = vector.multi_reduction <add>, %131, %cst_48 [1] : vector<1x256xf32> to vector<1xf32>
    %133 = vector.shape_cast %132 : vector<1xf32> to vector<1x1xf32>
    %cst_49 = arith.constant 1.000000e+00 : f32
    %134 = vector.broadcast %cst_49 : f32 to vector<1x1xf32>
    %135 = arith.divf %134, %133 : vector<1x1xf32>
    %136 = vector.broadcast %135 : vector<1x1xf32> to vector<1x256xf32>
    %137 = arith.mulf %131, %136 : vector<1x256xf32>
    %138 = vector.broadcast %137 : vector<1x256xf32> to vector<16x256xf32>
    %139 = arith.mulf %2, %138 : vector<16x256xf32>
    %cst_50 = arith.constant dense<0.000000e+00> : vector<16xf32>
    %140 = vector.multi_reduction <add>, %139, %cst_50 [1] : vector<16x256xf32> to vector<16xf32>
    %141 = vector.shape_cast %140 : vector<16xf32> to vector<16x1xf32>
    %c0_51 = arith.constant 0 : index
    %c0_52 = arith.constant 0 : index
    %c0_53 = arith.constant 0 : index
    %142 = vector.load %arg6[%c0_51, %c0_52, %c0_53] : memref<2x3x8xf32, #tpu.memory_space<vmem>>, vector<1x3x8xf32>
    %143 = vector.shape_cast %142 : vector<1x3x8xf32> to vector<3x8xf32>
    %c0_54 = arith.constant 0 : index
    %c0_55 = arith.constant 0 : index
    %c0_56 = arith.constant 0 : index
    %144 = vector.load %arg7[%c0_54, %c0_55, %c0_56] : memref<2x16x8xf32, #tpu.memory_space<vmem>>, vector<1x16x8xf32>
    %145 = vector.shape_cast %144 : vector<1x16x8xf32> to vector<16x8xf32>
    %146 = vector.broadcast %141 : vector<16x1xf32> to vector<16x8xf32>
    %147 = arith.mulf %145, %146 : vector<16x8xf32>
    %cst_57 = arith.constant dense<0.000000e+00> : vector<8xf32>
    %148 = vector.multi_reduction <add>, %147, %cst_57 [0] : vector<16x8xf32> to vector<8xf32>
    %149 = vector.shape_cast %148 : vector<8xf32> to vector<1x8xf32>
    %150 = vector.extract_strided_slice %143 {offsets = [0, 0], sizes = [1, 8], strides = [1, 1]} : vector<3x8xf32> to vector<1x8xf32>
    %151 = arith.addf %149, %150 : vector<1x8xf32>
    %152 = vector.shape_cast %151 : vector<1x8xf32> to vector<1x1x8xf32>
    %cst_58 = arith.constant dense<0.000000e+00> : vector<1xf32>
    %153 = vector.multi_reduction <add>, %152, %cst_58 [1, 2] : vector<1x1x8xf32> to vector<1xf32>
    %154 = vector.shape_cast %153 : vector<1xf32> to vector<1x1x1xf32>
    %155 = vector.extract %154[0, 0, 0] : f32 from vector<1x1x1xf32>
    %cst_59 = arith.constant 8.000000e+00 : f32
    %156 = arith.divf %155, %cst_59 : f32
    %157 = vector.broadcast %156 : f32 to vector<1x8xf32>
    %158 = arith.subf %151, %157 : vector<1x8xf32>
    %159 = arith.mulf %158, %158 : vector<1x8xf32>
    %160 = vector.shape_cast %159 : vector<1x8xf32> to vector<1x1x8xf32>
    %cst_60 = arith.constant dense<0.000000e+00> : vector<1xf32>
    %161 = vector.multi_reduction <add>, %160, %cst_60 [1, 2] : vector<1x1x8xf32> to vector<1xf32>
    %162 = vector.shape_cast %161 : vector<1xf32> to vector<1x1x1xf32>
    %163 = vector.extract %162[0, 0, 0] : f32 from vector<1x1x1xf32>
    %cst_61 = arith.constant 8.000000e+00 : f32
    %164 = arith.divf %163, %cst_61 : f32
    %165 = vector.broadcast %156 : f32 to vector<1x8xf32>
    %166 = arith.subf %151, %165 : vector<1x8xf32>
    %cst_62 = arith.constant 9.99999974E-6 : f32
    %167 = arith.addf %164, %cst_62 : f32
    %168 = math.rsqrt %167 : f32
    %169 = vector.broadcast %168 : f32 to vector<1x8xf32>
    %170 = arith.mulf %166, %169 : vector<1x8xf32>
    %171 = vector.extract_strided_slice %143 {offsets = [1, 0], sizes = [1, 8], strides = [1, 1]} : vector<3x8xf32> to vector<1x8xf32>
    %172 = arith.mulf %170, %171 : vector<1x8xf32>
    %173 = vector.extract_strided_slice %143 {offsets = [2, 0], sizes = [1, 8], strides = [1, 1]} : vector<3x8xf32> to vector<1x8xf32>
    %174 = arith.addf %172, %173 : vector<1x8xf32>
    %cst_63 = arith.constant 0.000000e+00 : f32
    %175 = vector.broadcast %cst_63 : f32 to vector<1x8xf32>
    %176 = arith.maximumf %174, %175 : vector<1x8xf32>
    %c0_64 = arith.constant 0 : index
    %c0_65 = arith.constant 0 : index
    %c0_66 = arith.constant 0 : index
    %177 = vector.load %arg8[%c0_64, %c0_65, %c0_66] : memref<2x16x8xf32, #tpu.memory_space<vmem>>, vector<1x16x8xf32>
    %178 = vector.shape_cast %177 : vector<1x16x8xf32> to vector<16x8xf32>
    %179 = vector.broadcast %176 : vector<1x8xf32> to vector<16x8xf32>
    %180 = arith.mulf %178, %179 : vector<16x8xf32>
    %cst_67 = arith.constant dense<0.000000e+00> : vector<16xf32>
    %181 = vector.multi_reduction <add>, %180, %cst_67 [1] : vector<16x8xf32> to vector<16xf32>
    %182 = vector.shape_cast %181 : vector<16xf32> to vector<16x1xf32>
    %c0_68 = arith.constant 0 : index
    %c0_69 = arith.constant 0 : index
    %c0_70 = arith.constant 0 : index
    %183 = vector.load %arg5[%c0_68, %c0_69, %c0_70] : memref<2x16x2xf32, #tpu.memory_space<vmem>>, vector<1x16x2xf32>
    %184 = vector.shape_cast %183 : vector<1x16x2xf32> to vector<16x2xf32>
    %185 = vector.extract_strided_slice %184 {offsets = [0, 1], sizes = [16, 1], strides = [1, 1]} : vector<16x2xf32> to vector<16x1xf32>
    %186 = arith.addf %182, %185 : vector<16x1xf32>
    %c1 = arith.constant 1 : index
    %c0_71 = arith.constant 0 : index
    %c0_72 = arith.constant 0 : index
    %187 = vector.load %arg5[%c1, %c0_71, %c0_72] : memref<2x16x2xf32, #tpu.memory_space<vmem>>, vector<1x16x2xf32>
    %188 = vector.shape_cast %187 : vector<1x16x2xf32> to vector<16x2xf32>
    %189 = vector.extract_strided_slice %188 {offsets = [0, 0], sizes = [16, 1], strides = [1, 1]} : vector<16x2xf32> to vector<16x1xf32>
    %190 = vector.broadcast %189 : vector<16x1xf32> to vector<16x256xf32>
    %191 = arith.mulf %5, %190 : vector<16x256xf32>
    %cst_73 = arith.constant dense<0.000000e+00> : vector<256xf32>
    %192 = vector.multi_reduction <add>, %191, %cst_73 [0] : vector<16x256xf32> to vector<256xf32>
    %193 = vector.shape_cast %192 : vector<256xf32> to vector<1x256xf32>
    %c1_74 = arith.constant 1 : index
    %194 = memref.load %arg4[%c1_74] : memref<2xf32, #tpu.memory_space<smem>>
    %195 = vector.broadcast %194 : f32 to vector<1x256xf32>
    %196 = arith.addf %193, %195 : vector<1x256xf32>
    %cst_75 = arith.constant dense<0xFF800000> : vector<1xf32>
    %197 = vector.multi_reduction <maximumf>, %196, %cst_75 [1] : vector<1x256xf32> to vector<1xf32>
    %198 = vector.shape_cast %197 : vector<1xf32> to vector<1x1xf32>
    %199 = vector.broadcast %198 : vector<1x1xf32> to vector<1x256xf32>
    %200 = arith.subf %196, %199 : vector<1x256xf32>
    %201 = math.exp %200 : vector<1x256xf32>
    %cst_76 = arith.constant dense<0.000000e+00> : vector<1xf32>
    %202 = vector.multi_reduction <add>, %201, %cst_76 [1] : vector<1x256xf32> to vector<1xf32>
    %203 = vector.shape_cast %202 : vector<1xf32> to vector<1x1xf32>
    %cst_77 = arith.constant 1.000000e+00 : f32
    %204 = vector.broadcast %cst_77 : f32 to vector<1x1xf32>
    %205 = arith.divf %204, %203 : vector<1x1xf32>
    %206 = vector.broadcast %205 : vector<1x1xf32> to vector<1x256xf32>
    %207 = arith.mulf %201, %206 : vector<1x256xf32>
    %208 = vector.broadcast %207 : vector<1x256xf32> to vector<16x256xf32>
    %209 = arith.mulf %5, %208 : vector<16x256xf32>
    %cst_78 = arith.constant dense<0.000000e+00> : vector<16xf32>
    %210 = vector.multi_reduction <add>, %209, %cst_78 [1] : vector<16x256xf32> to vector<16xf32>
    %211 = vector.shape_cast %210 : vector<16xf32> to vector<16x1xf32>
    %c1_79 = arith.constant 1 : index
    %c0_80 = arith.constant 0 : index
    %c0_81 = arith.constant 0 : index
    %212 = vector.load %arg6[%c1_79, %c0_80, %c0_81] : memref<2x3x8xf32, #tpu.memory_space<vmem>>, vector<1x3x8xf32>
    %213 = vector.shape_cast %212 : vector<1x3x8xf32> to vector<3x8xf32>
    %c1_82 = arith.constant 1 : index
    %c0_83 = arith.constant 0 : index
    %c0_84 = arith.constant 0 : index
    %214 = vector.load %arg7[%c1_82, %c0_83, %c0_84] : memref<2x16x8xf32, #tpu.memory_space<vmem>>, vector<1x16x8xf32>
    %215 = vector.shape_cast %214 : vector<1x16x8xf32> to vector<16x8xf32>
    %216 = vector.broadcast %211 : vector<16x1xf32> to vector<16x8xf32>
    %217 = arith.mulf %215, %216 : vector<16x8xf32>
    %cst_85 = arith.constant dense<0.000000e+00> : vector<8xf32>
    %218 = vector.multi_reduction <add>, %217, %cst_85 [0] : vector<16x8xf32> to vector<8xf32>
    %219 = vector.shape_cast %218 : vector<8xf32> to vector<1x8xf32>
    %220 = vector.extract_strided_slice %213 {offsets = [0, 0], sizes = [1, 8], strides = [1, 1]} : vector<3x8xf32> to vector<1x8xf32>
    %221 = arith.addf %219, %220 : vector<1x8xf32>
    %222 = vector.shape_cast %221 : vector<1x8xf32> to vector<1x1x8xf32>
    %cst_86 = arith.constant dense<0.000000e+00> : vector<1xf32>
    %223 = vector.multi_reduction <add>, %222, %cst_86 [1, 2] : vector<1x1x8xf32> to vector<1xf32>
    %224 = vector.shape_cast %223 : vector<1xf32> to vector<1x1x1xf32>
    %225 = vector.extract %224[0, 0, 0] : f32 from vector<1x1x1xf32>
    %cst_87 = arith.constant 8.000000e+00 : f32
    %226 = arith.divf %225, %cst_87 : f32
    %227 = vector.broadcast %226 : f32 to vector<1x8xf32>
    %228 = arith.subf %221, %227 : vector<1x8xf32>
    %229 = arith.mulf %228, %228 : vector<1x8xf32>
    %230 = vector.shape_cast %229 : vector<1x8xf32> to vector<1x1x8xf32>
    %cst_88 = arith.constant dense<0.000000e+00> : vector<1xf32>
    %231 = vector.multi_reduction <add>, %230, %cst_88 [1, 2] : vector<1x1x8xf32> to vector<1xf32>
    %232 = vector.shape_cast %231 : vector<1xf32> to vector<1x1x1xf32>
    %233 = vector.extract %232[0, 0, 0] : f32 from vector<1x1x1xf32>
    %cst_89 = arith.constant 8.000000e+00 : f32
    %234 = arith.divf %233, %cst_89 : f32
    %235 = vector.broadcast %226 : f32 to vector<1x8xf32>
    %236 = arith.subf %221, %235 : vector<1x8xf32>
    %cst_90 = arith.constant 9.99999974E-6 : f32
    %237 = arith.addf %234, %cst_90 : f32
    %238 = math.rsqrt %237 : f32
    %239 = vector.broadcast %238 : f32 to vector<1x8xf32>
    %240 = arith.mulf %236, %239 : vector<1x8xf32>
    %241 = vector.extract_strided_slice %213 {offsets = [1, 0], sizes = [1, 8], strides = [1, 1]} : vector<3x8xf32> to vector<1x8xf32>
    %242 = arith.mulf %240, %241 : vector<1x8xf32>
    %243 = vector.extract_strided_slice %213 {offsets = [2, 0], sizes = [1, 8], strides = [1, 1]} : vector<3x8xf32> to vector<1x8xf32>
    %244 = arith.addf %242, %243 : vector<1x8xf32>
    %cst_91 = arith.constant 0.000000e+00 : f32
    %245 = vector.broadcast %cst_91 : f32 to vector<1x8xf32>
    %246 = arith.maximumf %244, %245 : vector<1x8xf32>
    %c1_92 = arith.constant 1 : index
    %c0_93 = arith.constant 0 : index
    %c0_94 = arith.constant 0 : index
    %247 = vector.load %arg8[%c1_92, %c0_93, %c0_94] : memref<2x16x8xf32, #tpu.memory_space<vmem>>, vector<1x16x8xf32>
    %248 = vector.shape_cast %247 : vector<1x16x8xf32> to vector<16x8xf32>
    %249 = vector.broadcast %246 : vector<1x8xf32> to vector<16x8xf32>
    %250 = arith.mulf %248, %249 : vector<16x8xf32>
    %cst_95 = arith.constant dense<0.000000e+00> : vector<16xf32>
    %251 = vector.multi_reduction <add>, %250, %cst_95 [1] : vector<16x8xf32> to vector<16xf32>
    %252 = vector.shape_cast %251 : vector<16xf32> to vector<16x1xf32>
    %c1_96 = arith.constant 1 : index
    %c0_97 = arith.constant 0 : index
    %c0_98 = arith.constant 0 : index
    %253 = vector.load %arg5[%c1_96, %c0_97, %c0_98] : memref<2x16x2xf32, #tpu.memory_space<vmem>>, vector<1x16x2xf32>
    %254 = vector.shape_cast %253 : vector<1x16x2xf32> to vector<16x2xf32>
    %255 = vector.extract_strided_slice %254 {offsets = [0, 1], sizes = [16, 1], strides = [1, 1]} : vector<16x2xf32> to vector<16x1xf32>
    %256 = arith.addf %252, %255 : vector<16x1xf32>
    %257 = arith.subf %186, %256 : vector<16x1xf32>
    %cst_99 = arith.constant dense<0.000000e+00> : vector<16xf32>
    %258 = vector.multi_reduction <add>, %86, %cst_99 [1] : vector<16x256xf32> to vector<16xf32>
    %259 = vector.shape_cast %258 : vector<16xf32> to vector<16x1xf32>
    %260 = vector.shape_cast %87 : vector<16x256xf32> to vector<1x16x256xf32>
    %cst_100 = arith.constant dense<0.000000e+00> : vector<1xf32>
    %261 = vector.multi_reduction <add>, %260, %cst_100 [1, 2] : vector<1x16x256xf32> to vector<1xf32>
    %262 = vector.shape_cast %261 : vector<1xf32> to vector<1x1x1xf32>
    %263 = vector.extract %262[0, 0, 0] : f32 from vector<1x1x1xf32>
    %264 = arith.mulf %257, %259 : vector<16x1xf32>
    %265 = vector.shape_cast %264 : vector<16x1xf32> to vector<1x16x1xf32>
    %cst_101 = arith.constant dense<0.000000e+00> : vector<1xf32>
    %266 = vector.multi_reduction <add>, %265, %cst_101 [1, 2] : vector<1x16x1xf32> to vector<1xf32>
    %267 = vector.shape_cast %266 : vector<1xf32> to vector<1x1x1xf32>
    %268 = vector.extract %267[0, 0, 0] : f32 from vector<1x1x1xf32>
    %cst_102 = arith.constant 2.000000e+00 : f32
    %269 = arith.mulf %cst_102, %268 : f32
    %270 = arith.addf %263, %269 : f32
    %271 = arith.mulf %257, %257 : vector<16x1xf32>
    %272 = vector.shape_cast %271 : vector<16x1xf32> to vector<1x16x1xf32>
    %cst_103 = arith.constant dense<0.000000e+00> : vector<1xf32>
    %273 = vector.multi_reduction <add>, %272, %cst_103 [1, 2] : vector<1x16x1xf32> to vector<1xf32>
    %274 = vector.shape_cast %273 : vector<1xf32> to vector<1x1x1xf32>
    %275 = vector.extract %274[0, 0, 0] : f32 from vector<1x1x1xf32>
    %cst_104 = arith.constant 2.560000e+02 : f32
    %276 = arith.mulf %cst_104, %275 : f32
    %277 = arith.addf %270, %276 : f32
    %cst_105 = arith.constant 1.000000e-03 : f32
    %278 = arith.mulf %cst_105, %103 : f32
    %cst_106 = arith.constant 1.000000e-03 : f32
    %279 = arith.mulf %cst_106, %116 : f32
    %280 = arith.addf %278, %279 : f32
    %cst_107 = arith.constant 5.000000e-06 : f32
    %281 = arith.mulf %cst_107, %277 : f32
    %282 = arith.addf %280, %281 : f32
    %cst_108 = arith.constant 2.000000e+00 : f32
    %283 = arith.divf %282, %cst_108 : f32
    %cst_109 = arith.constant 0.000000e+00 : f32
    %284 = vector.broadcast %cst_109 : f32 to vector<1x1x128xf32>
    %285 = vector.broadcast %283 : f32 to vector<1x1x128xf32>
    %286 = arith.addf %284, %285 : vector<1x1x128xf32>
    %c0_110 = arith.constant 0 : index
    %c0_111 = arith.constant 0 : index
    %c0_112 = arith.constant 0 : index
    %287 = vector.load %arg9[%c0_110, %c0_111, %c0_112] : memref<1x1x128xf32, #tpu.memory_space<vmem>>, vector<1x1x128xf32>
    tpu.vector_store %arg9[%c0_110, %c0_111, %c0_112], %286 {strides = array<i32>} : memref<1x1x128xf32, #tpu.memory_space<vmem>>, vector<1x1x128xf32>,
    return
  }
  func.func @transform_0(%arg0: i32) -> (i32, i32, i32) {
    %c0_i32 = arith.constant 0 : i32
    %c0_i32_0 = arith.constant 0 : i32
    %c0_i32_1 = arith.constant 0 : i32
    return %arg0, %c0_i32, %c0_i32_0 : i32, i32, i32
  }
  func.func @transform_1(%arg0: i32) -> (i32, i32, i32) {
    %c0_i32 = arith.constant 0 : i32
    %c0_i32_0 = arith.constant 0 : i32
    %c0_i32_1 = arith.constant 0 : i32
    return %arg0, %c0_i32, %c0_i32_0 : i32, i32, i32
  }
  func.func @transform_2(%arg0: i32) -> (i32, i32, i32) {
    %c0_i32 = arith.constant 0 : i32
    %c0_i32_0 = arith.constant 0 : i32
    %c0_i32_1 = arith.constant 0 : i32
    return %arg0, %c0_i32, %c0_i32_0 : i32, i32, i32
  }
  func.func @transform_3(%arg0: i32) -> i32 {
    %c0_i32 = arith.constant 0 : i32
    %c0_i32_0 = arith.constant 0 : i32
    return %c0_i32 : i32
  }
  func.func @transform_4(%arg0: i32) -> (i32, i32, i32) {
    %c0_i32 = arith.constant 0 : i32
    %c0_i32_0 = arith.constant 0 : i32
    %c0_i32_1 = arith.constant 0 : i32
    %c0_i32_2 = arith.constant 0 : i32
    return %c0_i32, %c0_i32_0, %c0_i32_1 : i32, i32, i32
  }
  func.func @transform_5(%arg0: i32) -> (i32, i32, i32) {
    %c0_i32 = arith.constant 0 : i32
    %c0_i32_0 = arith.constant 0 : i32
    %c0_i32_1 = arith.constant 0 : i32
    %c0_i32_2 = arith.constant 0 : i32
    return %c0_i32, %c0_i32_0, %c0_i32_1 : i32, i32, i32
  }
  func.func @transform_6(%arg0: i32) -> (i32, i32, i32) {
    %c0_i32 = arith.constant 0 : i32
    %c0_i32_0 = arith.constant 0 : i32
    %c0_i32_1 = arith.constant 0 : i32
    %c0_i32_2 = arith.constant 0 : i32
    return %c0_i32, %c0_i32_0, %c0_i32_1 : i32, i32, i32
  }
  func.func @transform_7(%arg0: i32) -> (i32, i32, i32) {
    %c0_i32 = arith.constant 0 : i32
    %c0_i32_0 = arith.constant 0 : i32
    %c0_i32_1 = arith.constant 0 : i32
    %c0_i32_2 = arith.constant 0 : i32
    return %c0_i32, %c0_i32_0, %c0_i32_1 : i32, i32, i32
  }
  func.func @transform_8(%arg0: i32) -> (i32, i32, i32) {
    %c0_i32 = arith.constant 0 : i32
    %c0_i32_0 = arith.constant 0 : i32
    %c0_i32_1 = arith.constant 0 : i32
    return %arg0, %c0_i32, %c0_i32_0 : i32, i32, i32
  }
}

</mosaic_0001>

<llo_original>
// kernel: tpu_custom_call.1
$region0: #{tpu_custom_call.1}
  #allocation0 [shape = 'u32[]', space=smem, size = 0x4, offset = 0x4, fixed_abs, tag = 'smem constant byte address 0x4 - core index']
  #allocation1 [shape = 'u32[72,128]{1,0:T(1,128)}', space=vmem, size = 0x9000, scoped, tag = 'internal scratch']
  %s0 = inlined_call_operand.vmem [shape: bf16[2,16,256], index: 0, kind: input, shape index: {}]
  %s1 = inlined_call_operand.vmem [shape: bf16[2,16,256], index: 1, kind: input, shape index: {}]
  %s2 = inlined_call_operand.vmem [shape: f32[2,1,256], index: 2, kind: input, shape index: {}]
  %s3 = inlined_call_operand.vmem [shape: f32[2], index: 3, kind: input, shape index: {}]
  %s4 = inlined_call_operand.vmem [shape: f32[2,16,2], index: 4, kind: input, shape index: {}]
  %s5 = inlined_call_operand.vmem [shape: f32[2,3,8], index: 5, kind: input, shape index: {}]
  %s6 = inlined_call_operand.vmem [shape: f32[2,16,8], index: 6, kind: input, shape index: {}]
  %s7 = inlined_call_operand.vmem [shape: f32[2,16,8], index: 7, kind: input, shape index: {}]
  %s8 = inlined_call_operand.hbm [shape: f32[2,1,128], index: 8, kind: output, shape index: {}]
  %s9 = sld [smem:[#allocation0]]
  $region69: #{tpu_custom_call.1} parent=0
    _
  %s11 = ssub.s32 1, %s9
  %s12 = scalar_select 0, %s11, %s9
  $region1: #{tpu_custom_call.1} parent=0
    #allocation2 [shape = 'u8[512]{0}', space=smem, size = 0x200, scoped, tag = 'input window, operand 3, single buffered']
    #allocation3 [shape = 's32[2]{0}', space=sflag, size = 0x8, scoped, tag = 'scoped memory for tpu_custom_call.1']
    #allocation4 [shape = 's32[2]{0}', space=sflag, size = 0x8, scoped, tag = 'scoped memory for tpu_custom_call.1']
    #allocation5 [shape = 'u8[1024]{0}', space=vmem, size = 0x400, scoped, tag = 'output window, operand 0']
    %13 = vsyncpa [#allocation4], 0
    %14 = vsyncpa [#allocation3], 0
    %s15 = scalar_lea.sflag [#allocation3], 1
    %16 = vsyncpa %s15, 0
    loop: start=0, step=1, limit=4
    $region2: #{tpu_custom_call.1} parent=1 // loop_pre_header
      _
    $region3: #{tpu_custom_call.1} parent=1 // loop_header
      %s18 = sphi 0, %s22
      %p19 = scmp.ge.s32.totalorder %s18, 4
      %s28 = sphi 0, %s30
      %s31 = sphi 0, %s28
      %s32 = sphi 0, %s31
      %s48 = sphi 0, %s32
      %s54 = sphi 0, %s56
      %s57 = sphi 0, %s54
      %s58 = sphi 0, %s57
      %s74 = sphi 0, %s58
      %s80 = sphi 0, %s82
      %s83 = sphi 0, %s80
      %s84 = sphi 0, %s83
      %s100 = sphi 0, %s84
      %s104 = sphi 0, %s104
      %s106 = sphi 0, %s104
      %s107 = sphi 0, %s106
      %s121 = sphi 0, %s107
      %s125 = sphi 0, %s125
      %s127 = sphi 0, %s125
      %s128 = sphi 0, %s127
      %s142 = sphi 0, %s128
      %s146 = sphi 0, %s146
      %s148 = sphi 0, %s146
      %s149 = sphi 0, %s148
      %s163 = sphi 0, %s149
      %s167 = sphi 0, %s167
      %s169 = sphi 0, %s167
      %s170 = sphi 0, %s169
      %s184 = sphi 0, %s170
      %s188 = sphi 0, %s188
      %s190 = sphi 0, %s188
      %s191 = sphi 0, %s190
      %s205 = sphi 0, %s191
      %s211 = sphi 0, %s213
      %s214 = sphi 0, %s211
      %s215 = sphi 0, %s214
      %s231 = sphi 0, %s215
    $region4: #{tpu_custom_call.1} parent=1 // loop_header_branch
      %21 = sbr.rel (%p19) target = $region8
    $region5: #{tpu_custom_call.1} parent=1 // loop_body
      %s23 = ssub.s32 %s18, 1
      %s24 = ssub.s32 %s18, 2
      %s25 = sadd.s32 %s18, 1
      %s26 = ssub.s32 %s18, %s25
      %p27 = scmp.eq.s32.totalorder %s26, 0
      %s29 = sadd.s32 %s28, 1
      %s30 = scalar_select %p27, %s28, %s29
      %p33 = pneg %p27
      %p34 = scmp.eq.s32.totalorder %s18, 1
      %p35 = por %p33, %p34
      %p36 = scmp.ne.s32.totalorder %s28, %s31
      %p37 = scmp.eq.s32.totalorder %s18, 0
      %p38 = por %p36, %p37
      %p39 = scmp.ne.s32.totalorder %s28, %s31
      %p40 = scmp.eq.s32.totalorder %s23, 1
      %p41 = por %p39, %p40
      %p42 = scmp.ne.s32.totalorder %s31, %s32
      %p43 = scmp.eq.s32.totalorder %s23, 0
      %p44 = por %p42, %p43
      %p45 = scmp.ne.s32.totalorder %s31, %s32
      %p46 = scmp.eq.s32.totalorder %s24, 1
      %p47 = por %p45, %p46
      %p49 = scmp.ne.s32.totalorder %s32, %s48
      %p50 = scmp.eq.s32.totalorder %s24, 0
      %p51 = por %p49, %p50
      %s52 = ssub.s32 %s18, %s25
      %p53 = scmp.eq.s32.totalorder %s52, 0
      %s55 = sadd.s32 %s54, 1
      %s56 = scalar_select %p53, %s54, %s55
      %p59 = pneg %p53
      %p60 = scmp.eq.s32.totalorder %s18, 1
      %p61 = por %p59, %p60
      %p62 = scmp.ne.s32.totalorder %s54, %s57
      %p63 = scmp.eq.s32.totalorder %s18, 0
      %p64 = por %p62, %p63
      %p65 = scmp.ne.s32.totalorder %s54, %s57
      %p66 = scmp.eq.s32.totalorder %s23, 1
      %p67 = por %p65, %p66
      %p68 = scmp.ne.s32.totalorder %s57, %s58
      %p69 = scmp.eq.s32.totalorder %s23, 0
      %p70 = por %p68, %p69
      %p71 = scmp.ne.s32.totalorder %s57, %s58
      %p72 = scmp.eq.s32.totalorder %s24, 1
      %p73 = por %p71, %p72
      %p75 = scmp.ne.s32.totalorder %s58, %s74
      %p76 = scmp.eq.s32.totalorder %s24, 0
      %p77 = por %p75, %p76
      %s78 = ssub.s32 %s18, %s25
      %p79 = scmp.eq.s32.totalorder %s78, 0
      %s81 = sadd.s32 %s80, 1
      %s82 = scalar_select %p79, %s80, %s81
      %p85 = pneg %p79
      %p86 = scmp.eq.s32.totalorder %s18, 1
      %p87 = por %p85, %p86
      %p88 = scmp.ne.s32.totalorder %s80, %s83
      %p89 = scmp.eq.s32.totalorder %s18, 0
      %p90 = por %p88, %p89
      %p91 = scmp.ne.s32.totalorder %s80, %s83
      %p92 = scmp.eq.s32.totalorder %s23, 1
      %p93 = por %p91, %p92
      %p94 = scmp.ne.s32.totalorder %s83, %s84
      %p95 = scmp.eq.s32.totalorder %s23, 0
      %p96 = por %p94, %p95
      %p97 = scmp.ne.s32.totalorder %s83, %s84
      %p98 = scmp.eq.s32.totalorder %s24, 1
      %p99 = por %p97, %p98
      %p101 = scmp.ne.s32.totalorder %s84, %s100
      %p102 = scmp.eq.s32.totalorder %s24, 0
      %p103 = por %p101, %p102
      %s105 = sadd.s32 %s104, 1
      %p108 = scmp.eq.s32.totalorder %s18, 1
      %p109 = scmp.ne.s32.totalorder %s104, %s106
      %p110 = scmp.eq.s32.totalorder %s18, 0
      %p111 = por %p109, %p110
      %p112 = scmp.ne.s32.totalorder %s104, %s106
      %p113 = scmp.eq.s32.totalorder %s23, 1
      %p114 = por %p112, %p113
      %p115 = scmp.ne.s32.totalorder %s106, %s107
      %p116 = scmp.eq.s32.totalorder %s23, 0
      %p117 = por %p115, %p116
      %p118 = scmp.ne.s32.totalorder %s106, %s107
      %p119 = scmp.eq.s32.totalorder %s24, 1
      %p120 = por %p118, %p119
      %p122 = scmp.ne.s32.totalorder %s107, %s121
      %p123 = scmp.eq.s32.totalorder %s24, 0
      %p124 = por %p122, %p123
      %s126 = sadd.s32 %s125, 1
      %p129 = scmp.eq.s32.totalorder %s18, 1
      %p130 = scmp.ne.s32.totalorder %s125, %s127
      %p131 = scmp.eq.s32.totalorder %s18, 0
      %p132 = por %p130, %p131
      %p133 = scmp.ne.s32.totalorder %s125, %s127
      %p134 = scmp.eq.s32.totalorder %s23, 1
      %p135 = por %p133, %p134
      %p136 = scmp.ne.s32.totalorder %s127, %s128
      %p137 = scmp.eq.s32.totalorder %s23, 0
      %p138 = por %p136, %p137
      %p139 = scmp.ne.s32.totalorder %s127, %s128
      %p140 = scmp.eq.s32.totalorder %s24, 1
      %p141 = por %p139, %p140
      %p143 = scmp.ne.s32.totalorder %s128, %s142
      %p144 = scmp.eq.s32.totalorder %s24, 0
      %p145 = por %p143, %p144
      %s147 = sadd.s32 %s146, 1
      %p150 = scmp.eq.s32.totalorder %s18, 1
      %p151 = scmp.ne.s32.totalorder %s146, %s148
      %p152 = scmp.eq.s32.totalorder %s18, 0
      %p153 = por %p151, %p152
      %p154 = scmp.ne.s32.totalorder %s146, %s148
      %p155 = scmp.eq.s32.totalorder %s23, 1
      %p156 = por %p154, %p155
      %p157 = scmp.ne.s32.totalorder %s148, %s149
      %p158 = scmp.eq.s32.totalorder %s23, 0
      %p159 = por %p157, %p158
      %p160 = scmp.ne.s32.totalorder %s148, %s149
      %p161 = scmp.eq.s32.totalorder %s24, 1
      %p162 = por %p160, %p161
      %p164 = scmp.ne.s32.totalorder %s149, %s163
      %p165 = scmp.eq.s32.totalorder %s24, 0
      %p166 = por %p164, %p165
      %s168 = sadd.s32 %s167, 1
      %p171 = scmp.eq.s32.totalorder %s18, 1
      %p172 = scmp.ne.s32.totalorder %s167, %s169
      %p173 = scmp.eq.s32.totalorder %s18, 0
      %p174 = por %p172, %p173
      %p175 = scmp.ne.s32.totalorder %s167, %s169
      %p176 = scmp.eq.s32.totalorder %s23, 1
      %p177 = por %p175, %p176
      %p178 = scmp.ne.s32.totalorder %s169, %s170
      %p179 = scmp.eq.s32.totalorder %s23, 0
      %p180 = por %p178, %p179
      %p181 = scmp.ne.s32.totalorder %s169, %s170
      %p182 = scmp.eq.s32.totalorder %s24, 1
      %p183 = por %p181, %p182
      %p185 = scmp.ne.s32.totalorder %s170, %s184
      %p186 = scmp.eq.s32.totalorder %s24, 0
      %p187 = por %p185, %p186
      %s189 = sadd.s32 %s188, 1
      %p192 = scmp.eq.s32.totalorder %s18, 1
      %p193 = scmp.ne.s32.totalorder %s188, %s190
      %p194 = scmp.eq.s32.totalorder %s18, 0
      %p195 = por %p193, %p194
      %p196 = scmp.ne.s32.totalorder %s188, %s190
      %p197 = scmp.eq.s32.totalorder %s23, 1
      %p198 = por %p196, %p197
      %p199 = scmp.ne.s32.totalorder %s190, %s191
      %p200 = scmp.eq.s32.totalorder %s23, 0
      %p201 = por %p199, %p200
      %p202 = scmp.ne.s32.totalorder %s190, %s191
      %p203 = scmp.eq.s32.totalorder %s24, 1
      %p204 = por %p202, %p203
      %p206 = scmp.ne.s32.totalorder %s191, %s205
      %p207 = scmp.eq.s32.totalorder %s24, 0
      %p208 = por %p206, %p207
      %s209 = ssub.s32 %s18, %s25
      %p210 = scmp.eq.s32.totalorder %s209, 0
      %s212 = sadd.s32 %s211, 1
      %s213 = scalar_select %p210, %s211, %s212
      %p216 = pneg %p210
      %p217 = scmp.eq.s32.totalorder %s18, 1
      %p218 = por %p216, %p217
      %p219 = scmp.ne.s32.totalorder %s211, %s214
      %p220 = scmp.eq.s32.totalorder %s18, 0
      %p221 = por %p219, %p220
      %p222 = scmp.ne.s32.totalorder %s211, %s214
      %p223 = scmp.eq.s32.totalorder %s23, 1
      %p224 = por %p222, %p223
      %p225 = scmp.ne.s32.totalorder %s214, %s215
      %p226 = scmp.eq.s32.totalorder %s23, 0
      %p227 = por %p225, %p226
      %p228 = scmp.ne.s32.totalorder %s214, %s215
      %p229 = scmp.eq.s32.totalorder %s24, 1
      %p230 = por %p228, %p229
      %p232 = scmp.ne.s32.totalorder %s215, %s231
      %p233 = scmp.eq.s32.totalorder %s24, 0
      %p234 = por %p232, %p233
      %p235 = scmp.le.s32.totalorder 1, %s18
      %p236 = scmp.lt.s32.totalorder %s18, 3
      %p237 = pnand %p235, %p236
      %p238 = pneg %p237
      // Predicated region
      $region9: #{tpu_custom_call.1} parent=5 // pred_check
        _
      $region10: #{tpu_custom_call.1} parent=5 // pred_check_branch
        %240 = sbr.rel (%p237) target = $region12
      $region11: #{tpu_custom_call.1} parent=5 // pred_region
        %s241 = ssub.s32 %s18, 1
        // Predicated region
        $region13: #{tpu_custom_call.1} parent=11 // pred_check
          %p242 = pneg %p117
        $region14: #{tpu_custom_call.1} parent=11 // pred_check_branch
          %244 = sbr.rel (%p242) target = $region16
        $region15: #{tpu_custom_call.1} parent=11 // pred_region
          %246 = vsyncadd [#allocation4], 0
          %s248 = sshll.u32 %s3, 4
          %s249 = int_to_ptr.vmem [resolvable:$true] %s248
          %251 = dma.vmem_to_smem %s249, 16, [#allocation2], [#allocation4]
        $region16: #{tpu_custom_call.1} parent=11 // pred_fallthru
          _
        // Predicated region
        $region17: #{tpu_custom_call.1} parent=11 // pred_check
          %p252 = pneg %p138
        $region18: #{tpu_custom_call.1} parent=11 // pred_check_branch
          %254 = sbr.rel (%p252) target = $region20
        $region19: #{tpu_custom_call.1} parent=11 // pred_region
          _
        $region20: #{tpu_custom_call.1} parent=11 // pred_fallthru
          _
        // Predicated region
        $region21: #{tpu_custom_call.1} parent=11 // pred_check
          %p255 = pneg %p159
        $region22: #{tpu_custom_call.1} parent=11 // pred_check_branch
          %257 = sbr.rel (%p255) target = $region24
        $region23: #{tpu_custom_call.1} parent=11 // pred_region
          _
        $region24: #{tpu_custom_call.1} parent=11 // pred_fallthru
          _
        // Predicated region
        $region25: #{tpu_custom_call.1} parent=11 // pred_check
          %p258 = pneg %p180
        $region26: #{tpu_custom_call.1} parent=11 // pred_check_branch
          %260 = sbr.rel (%p258) target = $region28
        $region27: #{tpu_custom_call.1} parent=11 // pred_region
          _
        $region28: #{tpu_custom_call.1} parent=11 // pred_fallthru
          _
        // Predicated region
        $region29: #{tpu_custom_call.1} parent=11 // pred_check
          %p261 = pneg %p201
        $region30: #{tpu_custom_call.1} parent=11 // pred_check_branch
          %263 = sbr.rel (%p261) target = $region32
        $region31: #{tpu_custom_call.1} parent=11 // pred_region
          _
        $region32: #{tpu_custom_call.1} parent=11 // pred_fallthru
          _
      $region12: #{tpu_custom_call.1} parent=5 // pred_fallthru
        _
      %p264 = scmp.lt.s32.totalorder %s18, 2
      // Predicated region
      $region33: #{tpu_custom_call.1} parent=5 // pred_check
        %p265 = pneg %p264
      $region34: #{tpu_custom_call.1} parent=5 // pred_check_branch
        %267 = sbr.rel (%p265) target = $region36
      $region35: #{tpu_custom_call.1} parent=5 // pred_region
        // Predicated region
        $region37: #{tpu_custom_call.1} parent=35 // pred_check
          %p268 = pneg %p38
        $region38: #{tpu_custom_call.1} parent=35 // pred_check_branch
          %270 = sbr.rel (%p268) target = $region40
        $region39: #{tpu_custom_call.1} parent=35 // pred_region
          %p271 = scmp.lt.s32.totalorder %s18, 1
          %s272 = scalar_select %p271, %s18, 1
          %s273 = smul.addr %s272, 4
          %s274 = smul.addr %s273, 4
          %s275 = scalar_lea.vmem %s0, %s274
        $region40: #{tpu_custom_call.1} parent=35 // pred_fallthru
          _
        // Predicated region
        $region41: #{tpu_custom_call.1} parent=35 // pred_check
          %p276 = pneg %p64
        $region42: #{tpu_custom_call.1} parent=35 // pred_check_branch
          %278 = sbr.rel (%p276) target = $region44
        $region43: #{tpu_custom_call.1} parent=35 // pred_region
          %p279 = scmp.lt.s32.totalorder %s18, 1
          %s280 = scalar_select %p279, %s18, 1
          %s281 = smul.addr %s280, 4
          %s282 = smul.addr %s281, 4
          %s283 = scalar_lea.vmem %s1, %s282
        $region44: #{tpu_custom_call.1} parent=35 // pred_fallthru
          _
        // Predicated region
        $region45: #{tpu_custom_call.1} parent=35 // pred_check
          %p284 = pneg %p90
        $region46: #{tpu_custom_call.1} parent=35 // pred_check_branch
          %286 = sbr.rel (%p284) target = $region48
        $region47: #{tpu_custom_call.1} parent=35 // pred_region
          %p287 = scmp.lt.s32.totalorder %s18, 1
          %s288 = scalar_select %p287, %s18, 1
          %s289 = smul.addr %s288, 2
          %s290 = scalar_lea.vmem %s2, %s289
        $region48: #{tpu_custom_call.1} parent=35 // pred_fallthru
          _
      $region36: #{tpu_custom_call.1} parent=5 // pred_fallthru
        _
      %p291 = scmp.le.s32.totalorder 1, %s18
      %p292 = scmp.lt.s32.totalorder %s18, 3
      %p293 = pnand %p291, %p292
      %p294 = pneg %p293
      // Predicated region
      $region49: #{tpu_custom_call.1} parent=5 // pred_check
        _
      $region50: #{tpu_custom_call.1} parent=5 // pred_check_branch
        %296 = sbr.rel (%p293) target = $region52
      $region51: #{tpu_custom_call.1} parent=5 // pred_region
        %s297 = ssub.s32 %s18, 1
        // Predicated region
        $region53: #{tpu_custom_call.1} parent=51 // pred_check
          %p298 = pneg %p117
        $region54: #{tpu_custom_call.1} parent=51 // pred_check_branch
          %300 = sbr.rel (%p298) target = $region56
        $region55: #{tpu_custom_call.1} parent=51 // pred_region
          %302 = dma.done [#allocation4], 16
        $region56: #{tpu_custom_call.1} parent=51 // pred_fallthru
          _
        %303 = sfence
        %p304 = scmp.lt.s32.totalorder %s23, 1
        %s305 = scalar_select %p304, %s23, 1
        %s306 = smul.addr %s305, 4
        %s307 = smul.addr %s306, 4
        %s308 = scalar_lea.vmem %s0, %s307
        %p309 = pneg %p44
        %p310 = pneg %p41
        %p311 = scmp.lt.s32.totalorder %s23, 1
        %s312 = scalar_select %p311, %s23, 1
        %s313 = smul.addr %s312, 4
        %s314 = smul.addr %s313, 4
        %s315 = scalar_lea.vmem %s1, %s314
        %p316 = pneg %p70
        %p317 = pneg %p67
        %p318 = scmp.lt.s32.totalorder %s23, 1
        %s319 = scalar_select %p318, %s23, 1
        %s320 = smul.addr %s319, 2
        %s321 = scalar_lea.vmem %s2, %s320
        %p322 = pneg %p96
        %p323 = pneg %p93
        %p324 = pneg %p117
        %p325 = pneg %p114
        %p326 = pneg %p138
        %p327 = pneg %p135
        %p328 = pneg %p159
        %p329 = pneg %p156
        %p330 = pneg %p180
        %p331 = pneg %p177
        %p332 = pneg %p201
        %p333 = pneg %p198
        %p334 = pneg %p227
        %p335 = pneg %p224
        %s336 = sand.u32 %s214, 1
        %s337 = scalar_lea.sflag [#allocation3], %s336
        %s338 = sand.u32 %s214, 1
        %s339 = scalar_lea.vmem [#allocation5], %s338
        %p340 = scmp.lt.s32.totalorder %s23, 1
        %s341 = scalar_select %p340, %s23, 1
        %s342 = smul.addr %s341, 4
        %s343 = smul.addr %s342, 4
        %s344 = scalar_lea.vmem %s0, %s343
        %p345 = scmp.lt.s32.totalorder %s23, 1
        %s346 = scalar_select %p345, %s23, 1
        %s347 = smul.addr %s346, 4
        %s348 = smul.addr %s347, 4
        %s349 = scalar_lea.vmem %s1, %s348
        %p350 = scmp.lt.s32.totalorder %s23, 1
        %s351 = scalar_select %p350, %s23, 1
        %s352 = smul.addr %s351, 2
        %s353 = scalar_lea.vmem %s2, %s352
        %v354 = vld [vmem:[%s344] sm:$0xff]
        %v355 = vld [vmem:[%s344 + $0x8] sm:$0xff]
        %v356 = vunpack.c.l.bf16 %v354
        %v357 = vunpack.c.h.bf16 %v354
        %v358 = vunpack.c.l.bf16 %v355
        %v359 = vunpack.c.h.bf16 %v355
        %v360 = vld [vmem:[%s349] sm:$0xff]
        %v361 = vld [vmem:[%s349 + $0x8] sm:$0xff]
        %v362 = vunpack.c.l.bf16 %v360
        %v363 = vunpack.c.h.bf16 %v360
        %v364 = vunpack.c.l.bf16 %v361
        %v365 = vunpack.c.h.bf16 %v361
        %v366 = vld [vmem:[%s353] sm:$0x3]
        %v367 = vand.u32 2147483647, %v362
        %v368 = vand.u32 2147483647, %v363
        %v369 = vand.u32 2147483647, %v364
        %v370 = vand.u32 2147483647, %v365
        %v371 = vadd.f32 %v367, %v369
        %v372 = vrot.slane %v371, 4
        %v373 = vadd.f32 %v371, %v372
        %v374 = vrot.slane %v373, 2
        %v375 = vadd.f32 %v373, %v374
        %v376 = vrot.slane %v375, 1
        %v377 = vadd.f32 %v375, %v376
        %v378 = vadd.f32 %v368, %v370
        %v379 = vrot.slane %v378, 4
        %v380 = vadd.f32 %v378, %v379
        %v381 = vrot.slane %v380, 2
        %v382 = vadd.f32 %v380, %v381
        %v383 = vrot.slane %v382, 1
        %v384 = vadd.f32 %v382, %v383
        %v385 = vrcp.pop 16.0
        %v386 = vmul.f32 16.0, %v385
        %v387 = vsub.f32 1.0, %v386
        %v388 = vmul.f32 %v385, %v387
        %v389 = vadd.f32 %v385, %v388
        %vm390 = vweird.f32 %v385
        %v391 = vsel %vm390, %v385, %v389
        %v392 = vmul.f32 %v377, %v391
        %v393 = vmul.f32 %v384, %v391
        %v394 = vmul.f32 %v392, 2.0
        %v395 = vmul.f32 %v393, 2.0
        %v396 = vmax.f32 %v394, %v395
        %397 = vmax.xlane.f32.xlu0 %v396
        %v398 = vpop.xlane.xlu0 %397
        %v399 = vsub.f32 %v394, %v398
        %v400 = vsub.f32 %v395, %v398
        %v401 = vmul.f32 %v399, 1.442695
        %v402 = vpow.pop %v401
        %v403 = vmul.f32 %v400, 1.442695
        %v404 = vpow.pop %v403
        %v405 = vadd.f32 %v402, %v404
        %406 = vadd.xlane.f32.xlu0 %v405
        %v407 = vpop.xlane.xlu0 %406
        %v408 = vrcp.pop %v407
        %v409 = vmul.f32 %v407, %v408
        %v410 = vsub.f32 1.0, %v409
        %v411 = vmul.f32 %v408, %v410
        %v412 = vadd.f32 %v408, %v411
        %vm413 = vweird.f32 %v407
        %vm414 = vweird.f32 %v408
        %vm415 = vmor %vm413, %vm414
        %v416 = vsel %vm415, %v408, %v412
        %v417 = vand.u32 2147483647, %v407
        %vm418 = vcmp.eq.f32.partialorder %v417, 8.507059e+37
        %v419 = vand.u32 %v407, 2147483648
        %v420 = vor.u32 1.1754944e-38, %v419
        %v421 = vsel %vm418, %v420, %v416
        %v422 = vmul.f32 1.0, %v421
        %v423 = vmul.f32 %v402, %v422
        %v424 = vmul.f32 %v404, %v422
        %v425 = vmul.f32 %v423, 256.0
        %v426 = vmul.f32 %v424, 256.0
        %v427 = vadd.f32 %v367, %v368
        %428 = vadd.xlane.f32.xlu0 %v427
        %v429 = vpop.xlane.xlu0 %428
        %v430 = vadd.f32 %v369, %v370
        %431 = vadd.xlane.f32.xlu0 %v430
        %v432 = vpop.xlane.xlu0 %431
        %v433 = vrcp.pop 256.0
        %v434 = vmul.f32 256.0, %v433
        %v435 = vsub.f32 1.0, %v434
        %v436 = vmul.f32 %v433, %v435
        %v437 = vadd.f32 %v433, %v436
        %vm438 = vweird.f32 %v433
        %v439 = vsel %vm438, %v433, %v437
        %v440 = vmul.f32 %v429, %v439
        %v441 = vmul.f32 %v432, %v439
        %v442 = vmul.f32 %v440, 2.0
        %v443 = vmul.f32 %v441, 2.0
        %v444 = vmax.f32 %v442, %v443
        %v445 = vrot.slane %v444, 4
        %v446 = vmax.f32 %v444, %v445
        %v447 = vrot.slane %v446, 2
        %v448 = vmax.f32 %v446, %v447
        %v449 = vrot.slane %v448, 1
        %v450 = vmax.f32 %v448, %v449
        %v451 = vsub.f32 %v442, %v450
        %v452 = vsub.f32 %v443, %v450
        %v453 = vmul.f32 %v451, 1.442695
        %v454 = vpow.pop %v453
        %v455 = vmul.f32 %v452, 1.442695
        %v456 = vpow.pop %v455
        %v457 = vadd.f32 %v454, %v456
        %v458 = vrot.slane %v457, 4
        %v459 = vadd.f32 %v457, %v458
        %v460 = vrot.slane %v459, 2
        %v461 = vadd.f32 %v459, %v460
        %v462 = vrot.slane %v461, 1
        %v463 = vadd.f32 %v461, %v462
        %v464 = vrcp.pop %v463
        %v465 = vmul.f32 %v463, %v464
        %v466 = vsub.f32 1.0, %v465
        %v467 = vmul.f32 %v464, %v466
        %v468 = vadd.f32 %v464, %v467
        %vm469 = vweird.f32 %v463
        %vm470 = vweird.f32 %v464
        %vm471 = vmor %vm469, %vm470
        %v472 = vsel %vm471, %v464, %v468
        %v473 = vand.u32 2147483647, %v463
        %vm474 = vcmp.eq.f32.partialorder %v473, 8.507059e+37
        %v475 = vand.u32 %v463, 2147483648
        %v476 = vor.u32 1.1754944e-38, %v475
        %v477 = vsel %vm474, %v476, %v472
        %v478 = vmul.f32 1.0, %v477
        %v479 = vmul.f32 %v454, %v478
        %v480 = vmul.f32 %v456, %v478
        %v481 = vmul.f32 %v479, 16.0
        %v482 = vmul.f32 %v480, 16.0
        %v483 = vand.u32 2147483647, %v356
        %v484 = vand.u32 2147483647, %v357
        %v485 = vand.u32 2147483647, %v358
        %v486 = vand.u32 2147483647, %v359
        %v487 = vadd.f32 %v483, %v485
        %v488 = vrot.slane %v487, 4
        %v489 = vadd.f32 %v487, %v488
        %v490 = vrot.slane %v489, 2
        %v491 = vadd.f32 %v489, %v490
        %v492 = vrot.slane %v491, 1
        %v493 = vadd.f32 %v491, %v492
        %v494 = vadd.f32 %v484, %v486
        %v495 = vrot.slane %v494, 4
        %v496 = vadd.f32 %v494, %v495
        %v497 = vrot.slane %v496, 2
        %v498 = vadd.f32 %v496, %v497
        %v499 = vrot.slane %v498, 1
        %v500 = vadd.f32 %v498, %v499
        %v501 = vmul.f32 %v493, %v391
        %v502 = vmul.f32 %v500, %v391
        %v503 = vmul.f32 %v501, 2.0
        %v504 = vmul.f32 %v502, 2.0
        %v505 = vmax.f32 %v503, %v504
        %506 = vmax.xlane.f32.xlu0 %v505
        %v507 = vpop.xlane.xlu0 %506
        %v508 = vsub.f32 %v503, %v507
        %v509 = vsub.f32 %v504, %v507
        %v510 = vmul.f32 %v508, 1.442695
        %v511 = vpow.pop %v510
        %v512 = vmul.f32 %v509, 1.442695
        %v513 = vpow.pop %v512
        %v514 = vadd.f32 %v511, %v513
        %515 = vadd.xlane.f32.xlu0 %v514
        %v516 = vpop.xlane.xlu0 %515
        %v517 = vrcp.pop %v516
        %v518 = vmul.f32 %v516, %v517
        %v519 = vsub.f32 1.0, %v518
        %v520 = vmul.f32 %v517, %v519
        %v521 = vadd.f32 %v517, %v520
        %vm522 = vweird.f32 %v516
        %vm523 = vweird.f32 %v517
        %vm524 = vmor %vm522, %vm523
        %v525 = vsel %vm524, %v517, %v521
        %v526 = vand.u32 2147483647, %v516
        %vm527 = vcmp.eq.f32.partialorder %v526, 8.507059e+37
        %v528 = vand.u32 %v516, 2147483648
        %v529 = vor.u32 1.1754944e-38, %v528
        %v530 = vsel %vm527, %v529, %v525
        %v531 = vmul.f32 1.0, %v530
        %v532 = vmul.f32 %v511, %v531
        %v533 = vmul.f32 %v513, %v531
        %v534 = vmul.f32 %v532, 256.0
        %v535 = vmul.f32 %v533, 256.0
        %v536 = vadd.f32 %v483, %v484
        %537 = vadd.xlane.f32.xlu0 %v536
        %v538 = vpop.xlane.xlu0 %537
        %v539 = vadd.f32 %v485, %v486
        %540 = vadd.xlane.f32.xlu0 %v539
        %v541 = vpop.xlane.xlu0 %540
        %v542 = vmul.f32 %v538, %v439
        %v543 = vmul.f32 %v541, %v439
        %v544 = vmul.f32 %v542, 2.0
        %v545 = vmul.f32 %v543, 2.0
        %v546 = vmax.f32 %v544, %v545
        %v547 = vrot.slane %v546, 4
        %v548 = vmax.f32 %v546, %v547
        %v549 = vrot.slane %v548, 2
        %v550 = vmax.f32 %v548, %v549
        %v551 = vrot.slane %v550, 1
        %v552 = vmax.f32 %v550, %v551
        %v553 = vsub.f32 %v544, %v552
        %v554 = vsub.f32 %v545, %v552
        %v555 = vmul.f32 %v553, 1.442695
        %v556 = vpow.pop %v555
        %v557 = vmul.f32 %v554, 1.442695
        %v558 = vpow.pop %v557
        %v559 = vadd.f32 %v556, %v558
        %v560 = vrot.slane %v559, 4
        %v561 = vadd.f32 %v559, %v560
        %v562 = vrot.slane %v561, 2
        %v563 = vadd.f32 %v561, %v562
        %v564 = vrot.slane %v563, 1
        %v565 = vadd.f32 %v563, %v564
        %v566 = vrcp.pop %v565
        %v567 = vmul.f32 %v565, %v566
        %v568 = vsub.f32 1.0, %v567
        %v569 = vmul.f32 %v566, %v568
        %v570 = vadd.f32 %v566, %v569
        %vm571 = vweird.f32 %v565
        %vm572 = vweird.f32 %v566
        %vm573 = vmor %vm571, %vm572
        %v574 = vsel %vm573, %v566, %v570
        %v575 = vand.u32 2147483647, %v565
        %vm576 = vcmp.eq.f32.partialorder %v575, 8.507059e+37
        %v577 = vand.u32 %v565, 2147483648
        %v578 = vor.u32 1.1754944e-38, %v577
        %v579 = vsel %vm576, %v578, %v574
        %v580 = vmul.f32 1.0, %v579
        %v581 = vmul.f32 %v556, %v580
        %v582 = vmul.f32 %v558, %v580
        %v583 = vmul.f32 %v581, 16.0
        %v584 = vmul.f32 %v582, 16.0
        %v585 = vsub.f32 %v356, %v362
        %v586 = vsub.f32 %v357, %v363
        %v587 = vsub.f32 %v358, %v364
        %v588 = vsub.f32 %v359, %v365
        %v589 = vmul.f32 %v585, %v585
        %v590 = vmul.f32 %v586, %v586
        %v591 = vmul.f32 %v587, %v587
        %v592 = vmul.f32 %v588, %v588
        %v593 = vadd.f32 %v425, 1e-10
        %v594 = vadd.f32 %v426, 1e-10
        %v595 = vadd.f32 %v366, 1e-10
        %v597 = vperm.slane %v595, 0
        %v598 = vperm.slane %v595, 1
        %v601 = vmul.f32 %v593, %v597
        %v602 = vmul.f32 %v594, %v598
        %v603 = vperm.slane %v601, 0
        %v604 = vperm.slane %v602, 0
        %v605 = vmul.f32 %v589, %v603
        %v606 = vmul.f32 %v590, %v604
        %v607 = vmul.f32 %v591, %v603
        %v608 = vmul.f32 %v592, %v604
        %v609 = vadd.f32 %v605, %v606
        %610 = vadd.xlane.f32.xlu0 %v609
        %v611 = vpop.xlane.xlu0 %610
        %v612 = vadd.f32 %v607, %v608
        %613 = vadd.xlane.f32.xlu0 %v612
        %v614 = vpop.xlane.xlu0 %613
        %v615 = vadd.f32 %v481, 1e-10
        %v616 = vadd.f32 %v482, 1e-10
        %v617 = vmul.f32 %v611, %v615
        %v618 = vmul.f32 %v614, %v616
        %vm619 = vcmask 7168
        %v620 = vsel %vm619, %v617, 0.0
        %v621 = vsel %vm619, %v618, 0.0
        %v622 = vadd.f32 %v620, %v621
        %623 = vadd.xlane.f32.xlu0 %v622
        %v624 = vpop.xlane.xlu0 %623
        %v625 = vrot.slane %v624, 4
        %v626 = vadd.f32 %v624, %v625
        %v627 = vrot.slane %v626, 2
        %v628 = vadd.f32 %v626, %v627
        %v629 = vrot.slane %v628, 1
        %v630 = vadd.f32 %v628, %v629
        %s631 = vtos %v630
        %v632 = vsub.f32 %v583, %v481
        %v633 = vsub.f32 %v584, %v482
        %v634 = vand.u32 2147483647, %v632
        %v635 = vand.u32 2147483647, %v633
        %v636 = vsel %vm619, %v634, 0.0
        %v637 = vsel %vm619, %v635, 0.0
        %v638 = vadd.f32 %v636, %v637
        %639 = vadd.xlane.f32.xlu0 %v638
        %v640 = vpop.xlane.xlu0 %639
        %v641 = vrot.slane %v640, 4
        %v642 = vadd.f32 %v640, %v641
        %v643 = vrot.slane %v642, 2
        %v644 = vadd.f32 %v642, %v643
        %v645 = vrot.slane %v644, 1
        %v646 = vadd.f32 %v644, %v645
        %s647 = vtos %v646
        %v648 = vsub.f32 %v534, %v425
        %v649 = vsub.f32 %v535, %v426
        %v650 = vand.u32 2147483647, %v648
        %v651 = vand.u32 2147483647, %v649
        %vm652 = vcmask 1040384
        %v653 = vsel %vm652, %v650, 0.0
        %v654 = vsel %vm652, %v651, 0.0
        %v655 = vadd.f32 %v653, %v654
        %656 = vadd.xlane.f32.xlu0 %v655
        %v657 = vpop.xlane.xlu0 %656
        %v658 = vrot.slane %v657, 4
        %v659 = vadd.f32 %v657, %v658
        %v660 = vrot.slane %v659, 2
        %v661 = vadd.f32 %v659, %v660
        %v662 = vrot.slane %v661, 1
        %v663 = vadd.f32 %v661, %v662
        %s664 = vtos %v663
        %s665 = sadd.f32 %s647, %s664
        %v666 = vld [vmem:[%s4] sm:$0xff]
        %v667 = vld [vmem:[%s4 + $0x8] sm:$0xff]
        %669 = vset.pattern.permute.xlu0 0
        %670 = vperm.xlu0 %669, %v666
        %v671 = vpop.permute.xlu0 %670
        %674 = vset.pattern.permute.xlu0 0
        %675 = vperm.xlu0 %674, %v667
        %v676 = vpop.permute.xlu0 %675
        %v678 = vmul.f32 %v356, %v671
        %v679 = vmul.f32 %v357, %v671
        %v680 = vmul.f32 %v358, %v676
        %v681 = vmul.f32 %v359, %v676
        %v682 = vadd.f32 %v678, %v680
        %v683 = vrot.slane %v682, 4
        %v684 = vadd.f32 %v682, %v683
        %v685 = vrot.slane %v684, 2
        %v686 = vadd.f32 %v684, %v685
        %v687 = vrot.slane %v686, 1
        %v688 = vadd.f32 %v686, %v687
        %v689 = vadd.f32 %v679, %v681
        %v690 = vrot.slane %v689, 4
        %v691 = vadd.f32 %v689, %v690
        %v692 = vrot.slane %v691, 2
        %v693 = vadd.f32 %v691, %v692
        %v694 = vrot.slane %v693, 1
        %v695 = vadd.f32 %v693, %v694
        %s696 = sld [smem:[#allocation2]]
        %v697 = vstv %s696
        %v698 = vadd.f32 %v688, %v697
        %v699 = vadd.f32 %v695, %v697
        %v700 = vmax.f32 %v698, %v699
        %701 = vmax.xlane.f32.xlu0 %v700
        %v702 = vpop.xlane.xlu0 %701
        %v703 = vsub.f32 %v698, %v702
        %v704 = vsub.f32 %v699, %v702
        %v705 = vmul.f32 %v703, 1.442695
        %v706 = vpow.pop %v705
        %v707 = vmul.f32 %v704, 1.442695
        %v708 = vpow.pop %v707
        %v709 = vadd.f32 %v706, %v708
        %710 = vadd.xlane.f32.xlu0 %v709
        %v711 = vpop.xlane.xlu0 %710
        %v712 = vrcp.pop %v711
        %v713 = vmul.f32 %v711, %v712
        %v714 = vsub.f32 1.0, %v713
        %v715 = vmul.f32 %v712, %v714
        %v716 = vadd.f32 %v712, %v715
        %vm717 = vweird.f32 %v711
        %vm718 = vweird.f32 %v712
        %vm719 = vmor %vm717, %vm718
        %v720 = vsel %vm719, %v712, %v716
        %v721 = vand.u32 2147483647, %v711
        %vm722 = vcmp.eq.f32.partialorder %v721, 8.507059e+37
        %v723 = vand.u32 %v711, 2147483648
        %v724 = vor.u32 1.1754944e-38, %v723
        %v725 = vsel %vm722, %v724, %v720
        %v726 = vmul.f32 1.0, %v725
        %v727 = vmul.f32 %v706, %v726
        %v728 = vmul.f32 %v708, %v726
        %v729 = vmul.f32 %v356, %v727
        %v730 = vmul.f32 %v357, %v728
        %v731 = vmul.f32 %v358, %v727
        %v732 = vmul.f32 %v359, %v728
        %v733 = vadd.f32 %v729, %v730
        %734 = vadd.xlane.f32.xlu0 %v733
        %v735 = vpop.xlane.xlu0 %734
        %v736 = vadd.f32 %v731, %v732
        %737 = vadd.xlane.f32.xlu0 %v736
        %v738 = vpop.xlane.xlu0 %737
        %v739 = vld [vmem:[%s5] sm:$0x7]
        %v740 = vld [vmem:[%s6] sm:$0xff]
        %v741 = vld [vmem:[%s6 + $0x8] sm:$0xff]
        %v742 = vmul.f32 %v740, %v735
        %v743 = vmul.f32 %v741, %v738
        %vm744 = vcmask 64512
        %v745 = vsel %vm744, %v742, 0.0
        %v746 = vsel %vm744, %v743, 0.0
        %v747 = vadd.f32 %v745, %v746
        %v748 = vrot.slane %v747, 4
        %v749 = vadd.f32 %v747, %v748
        %v750 = vrot.slane %v749, 2
        %v751 = vadd.f32 %v749, %v750
        %v752 = vrot.slane %v751, 1
        %v753 = vadd.f32 %v751, %v752
        %v754 = vadd.f32 %v753, %v739
        %vm755 = vcmask 57344
        %v756 = vsel %vm755, %v754, 0.0
        %757 = vadd.xlane.f32.xlu0 %v756
        %v758 = vpop.xlane.xlu0 %757
        %v759 = vrot.slane %v758, 4
        %v760 = vadd.f32 %v758, %v759
        %v761 = vrot.slane %v760, 2
        %v762 = vadd.f32 %v760, %v761
        %v763 = vrot.slane %v762, 1
        %v764 = vadd.f32 %v762, %v763
        %s765 = vtos %v764
        %v766 = vrcp.pop 8.0
        %v767 = vmul.f32 8.0, %v766
        %v768 = vsub.f32 1.0, %v767
        %v769 = vmul.f32 %v766, %v768
        %v770 = vadd.f32 %v766, %v769
        %vm771 = vweird.f32 %v766
        %v772 = vsel %vm771, %v766, %v770
        %s773 = vtos %v772
        %s774 = smul.f32 %s765, %s773
        %v775 = vstv %s774
        %v776 = vsub.f32 %v754, %v775
        %v777 = vmul.f32 %v776, %v776
        %v778 = vsel %vm755, %v777, 0.0
        %779 = vadd.xlane.f32.xlu0 %v778
        %v780 = vpop.xlane.xlu0 %779
        %v781 = vrot.slane %v780, 4
        %v782 = vadd.f32 %v780, %v781
        %v783 = vrot.slane %v782, 2
        %v784 = vadd.f32 %v782, %v783
        %v785 = vrot.slane %v784, 1
        %v786 = vadd.f32 %v784, %v785
        %s787 = vtos %v786
        %v788 = vrcp.pop 8.0
        %v789 = vmul.f32 8.0, %v788
        %v790 = vsub.f32 1.0, %v789
        %v791 = vmul.f32 %v788, %v790
        %v792 = vadd.f32 %v788, %v791
        %vm793 = vweird.f32 %v788
        %v794 = vsel %vm793, %v788, %v792
        %s795 = vtos %v794
        %s796 = smul.f32 %s787, %s795
        %s797 = sadd.f32 %s796, 1e-05
        %v798 = vstv %s797
        %v799 = vrsqrt.pop %v798
        %v800 = vmul.f32 %v799, %v798
        %v801 = vmul.f32 %v800, %v799
        %v802 = vmul.f32 0.5, %v801
        %v803 = vsub.f32 1.5, %v802
        %v804 = vmul.f32 %v799, %v803
        %vm805 = vweird.f32 %v798
        %vm806 = vweird.f32 %v799
        %vm807 = vmor %vm805, %vm806
        %v808 = vsel %vm807, %v799, %v804
        %s809 = vtos %v808
        %v810 = vstv %s809
        %v811 = vmul.f32 %v776, %v810
        %v813 = vrot.slane %v739, 1
        %v815 = vmul.f32 %v811, %v813
        %v816 = vrot.slane %v739, 2
        %v818 = vadd.f32 %v815, %v816
        %v819 = vmax.f32 %v818, 0.0
        %v820 = vld [vmem:[%s7] sm:$0xff]
        %v821 = vld [vmem:[%s7 + $0x8] sm:$0xff]
        %v822 = vperm.slane %v819, 0
        %v823 = vmul.f32 %v820, %v822
        %v824 = vmul.f32 %v821, %v822
        %v825 = vsel %vm744, %v823, 0.0
        %826 = vadd.xlane.f32.xlu0 %v825
        %v827 = vpop.xlane.xlu0 %826
        %v828 = vsel %vm744, %v824, 0.0
        %829 = vadd.xlane.f32.xlu0 %v828
        %v830 = vpop.xlane.xlu0 %829
        %v831 = vadd.f32 %v827, %v666
        %v832 = vadd.f32 %v830, %v667
        %s833 = scalar_lea.vmem %s4, 16
        %v834 = vld [vmem:[%s833] sm:$0xff]
        %v835 = vld [vmem:[%s833 + $0x8] sm:$0xff]
        %837 = vset.pattern.permute.xlu0 0
        %838 = vperm.xlu0 %837, %v834
        %v839 = vpop.permute.xlu0 %838
        %842 = vset.pattern.permute.xlu0 0
        %843 = vperm.xlu0 %842, %v835
        %v844 = vpop.permute.xlu0 %843
        %v846 = vmul.f32 %v362, %v839
        %v847 = vmul.f32 %v363, %v839
        %v848 = vmul.f32 %v364, %v844
        %v849 = vmul.f32 %v365, %v844
        %v850 = vadd.f32 %v846, %v848
        %v851 = vrot.slane %v850, 4
        %v852 = vadd.f32 %v850, %v851
        %v853 = vrot.slane %v852, 2
        %v854 = vadd.f32 %v852, %v853
        %v855 = vrot.slane %v854, 1
        %v856 = vadd.f32 %v854, %v855
        %v857 = vadd.f32 %v847, %v849
        %v858 = vrot.slane %v857, 4
        %v859 = vadd.f32 %v857, %v858
        %v860 = vrot.slane %v859, 2
        %v861 = vadd.f32 %v859, %v860
        %v862 = vrot.slane %v861, 1
        %v863 = vadd.f32 %v861, %v862
        %s864 = sld [smem:[#allocation2 + $0x1]]
        %v865 = vstv %s864
        %v866 = vadd.f32 %v856, %v865
        %v867 = vadd.f32 %v863, %v865
        %v868 = vmax.f32 %v866, %v867
        %869 = vmax.xlane.f32.xlu0 %v868
        %v870 = vpop.xlane.xlu0 %869
        %v871 = vsub.f32 %v866, %v870
        %v872 = vsub.f32 %v867, %v870
        %v873 = vmul.f32 %v871, 1.442695
        %v874 = vpow.pop %v873
        %v875 = vmul.f32 %v872, 1.442695
        %v876 = vpow.pop %v875
        %v877 = vadd.f32 %v874, %v876
        %878 = vadd.xlane.f32.xlu0 %v877
        %v879 = vpop.xlane.xlu0 %878
        %v880 = vrcp.pop %v879
        %v881 = vmul.f32 %v879, %v880
        %v882 = vsub.f32 1.0, %v881
        %v883 = vmul.f32 %v880, %v882
        %v884 = vadd.f32 %v880, %v883
        %vm885 = vweird.f32 %v879
        %vm886 = vweird.f32 %v880
        %vm887 = vmor %vm885, %vm886
        %v888 = vsel %vm887, %v880, %v884
        %v889 = vand.u32 2147483647, %v879
        %vm890 = vcmp.eq.f32.partialorder %v889, 8.507059e+37
        %v891 = vand.u32 %v879, 2147483648
        %v892 = vor.u32 1.1754944e-38, %v891
        %v893 = vsel %vm890, %v892, %v888
        %v894 = vmul.f32 1.0, %v893
        %v895 = vmul.f32 %v874, %v894
        %v896 = vmul.f32 %v876, %v894
        %v897 = vmul.f32 %v362, %v895
        %v898 = vmul.f32 %v363, %v896
        %v899 = vmul.f32 %v364, %v895
        %v900 = vmul.f32 %v365, %v896
        %v901 = vadd.f32 %v897, %v898
        %902 = vadd.xlane.f32.xlu0 %v901
        %v903 = vpop.xlane.xlu0 %902
        %v904 = vadd.f32 %v899, %v900
        %905 = vadd.xlane.f32.xlu0 %v904
        %v906 = vpop.xlane.xlu0 %905
        %s907 = scalar_lea.vmem %s5, 4
        %v908 = vld [vmem:[%s907] sm:$0x7]
        %s909 = scalar_lea.vmem %s6, 16
        %v910 = vld [vmem:[%s909] sm:$0xff]
        %v911 = vld [vmem:[%s909 + $0x8] sm:$0xff]
        %v912 = vmul.f32 %v910, %v903
        %v913 = vmul.f32 %v911, %v906
        %v914 = vsel %vm744, %v912, 0.0
        %v915 = vsel %vm744, %v913, 0.0
        %v916 = vadd.f32 %v914, %v915
        %v917 = vrot.slane %v916, 4
        %v918 = vadd.f32 %v916, %v917
        %v919 = vrot.slane %v918, 2
        %v920 = vadd.f32 %v918, %v919
        %v921 = vrot.slane %v920, 1
        %v922 = vadd.f32 %v920, %v921
        %v923 = vadd.f32 %v922, %v908
        %v924 = vsel %vm755, %v923, 0.0
        %925 = vadd.xlane.f32.xlu0 %v924
        %v926 = vpop.xlane.xlu0 %925
        %v927 = vrot.slane %v926, 4
        %v928 = vadd.f32 %v926, %v927
        %v929 = vrot.slane %v928, 2
        %v930 = vadd.f32 %v928, %v929
        %v931 = vrot.slane %v930, 1
        %v932 = vadd.f32 %v930, %v931
        %s933 = vtos %v932
        %v934 = vrcp.pop 8.0
        %v935 = vmul.f32 8.0, %v934
        %v936 = vsub.f32 1.0, %v935
        %v937 = vmul.f32 %v934, %v936
        %v938 = vadd.f32 %v934, %v937
        %vm939 = vweird.f32 %v934
        %v940 = vsel %vm939, %v934, %v938
        %s941 = vtos %v940
        %s942 = smul.f32 %s933, %s941
        %v943 = vstv %s942
        %v944 = vsub.f32 %v923, %v943
        %v945 = vmul.f32 %v944, %v944
        %v946 = vsel %vm755, %v945, 0.0
        %947 = vadd.xlane.f32.xlu0 %v946
        %v948 = vpop.xlane.xlu0 %947
        %v949 = vrot.slane %v948, 4
        %v950 = vadd.f32 %v948, %v949
        %v951 = vrot.slane %v950, 2
        %v952 = vadd.f32 %v950, %v951
        %v953 = vrot.slane %v952, 1
        %v954 = vadd.f32 %v952, %v953
        %s955 = vtos %v954
        %v956 = vrcp.pop 8.0
        %v957 = vmul.f32 8.0, %v956
        %v958 = vsub.f32 1.0, %v957
        %v959 = vmul.f32 %v956, %v958
        %v960 = vadd.f32 %v956, %v959
        %vm961 = vweird.f32 %v956
        %v962 = vsel %vm961, %v956, %v960
        %s963 = vtos %v962
        %s964 = smul.f32 %s955, %s963
        %s965 = sadd.f32 %s964, 1e-05
        %v966 = vstv %s965
        %v967 = vrsqrt.pop %v966
        %v968 = vmul.f32 %v967, %v966
        %v969 = vmul.f32 %v968, %v967
        %v970 = vmul.f32 0.5, %v969
        %v971 = vsub.f32 1.5, %v970
        %v972 = vmul.f32 %v967, %v971
        %vm973 = vweird.f32 %v966
        %vm974 = vweird.f32 %v967
        %vm975 = vmor %vm973, %vm974
        %v976 = vsel %vm975, %v967, %v972
        %s977 = vtos %v976
        %v978 = vstv %s977
        %v979 = vmul.f32 %v944, %v978
        %v981 = vrot.slane %v908, 1
        %v983 = vmul.f32 %v979, %v981
        %v984 = vrot.slane %v908, 2
        %v986 = vadd.f32 %v983, %v984
        %v987 = vmax.f32 %v986, 0.0
        %s988 = scalar_lea.vmem %s7, 16
        %v989 = vld [vmem:[%s988] sm:$0xff]
        %v990 = vld [vmem:[%s988 + $0x8] sm:$0xff]
        %v991 = vperm.slane %v987, 0
        %v992 = vmul.f32 %v989, %v991
        %v993 = vmul.f32 %v990, %v991
        %v994 = vsel %vm744, %v992, 0.0
        %995 = vadd.xlane.f32.xlu0 %v994
        %v996 = vpop.xlane.xlu0 %995
        %v997 = vsel %vm744, %v993, 0.0
        %998 = vadd.xlane.f32.xlu0 %v997
        %v999 = vpop.xlane.xlu0 %998
        %v1000 = vadd.f32 %v996, %v834
        %v1001 = vadd.f32 %v999, %v835
        %v1002 = vsub.f32 %v831, %v1000
        %v1003 = vsub.f32 %v832, %v1001
        %v1004 = vadd.f32 %v585, %v586
        %1005 = vadd.xlane.f32.xlu0 %v1004
        %v1006 = vpop.xlane.xlu0 %1005
        %v1007 = vadd.f32 %v587, %v588
        %1008 = vadd.xlane.f32.xlu0 %v1007
        %v1009 = vpop.xlane.xlu0 %1008
        %v1010 = vadd.f32 %v589, %v590
        %v1011 = vadd.f32 %v1010, %v591
        %v1012 = vadd.f32 %v1011, %v592
        %1013 = vadd.xlane.f32.xlu0 %v1012
        %v1014 = vpop.xlane.xlu0 %1013
        %v1015 = vrot.slane %v1014, 4
        %v1016 = vadd.f32 %v1014, %v1015
        %v1017 = vrot.slane %v1016, 2
        %v1018 = vadd.f32 %v1016, %v1017
        %v1019 = vrot.slane %v1018, 1
        %v1020 = vadd.f32 %v1018, %v1019
        %s1021 = vtos %v1020
        %v1022 = vmul.f32 %v1002, %v1006
        %v1023 = vmul.f32 %v1003, %v1009
        %1026 = vrot.lane.b32.xlu0 %v1022, 127
        %v1027 = vpop.permute.xlu0 %1026
        %1028 = vrot.lane.b32.xlu0 %v1023, 127
        %v1029 = vpop.permute.xlu0 %1028
        %v1032 = vsel %vm619, %v1027, 0.0
        %v1033 = vsel %vm619, %v1029, 0.0
        %v1034 = vadd.f32 %v1032, %v1033
        %1035 = vadd.xlane.f32.xlu0 %v1034
        %v1036 = vpop.xlane.xlu0 %1035
        %v1037 = vrot.slane %v1036, 4
        %v1038 = vadd.f32 %v1036, %v1037
        %v1039 = vrot.slane %v1038, 2
        %v1040 = vadd.f32 %v1038, %v1039
        %v1041 = vrot.slane %v1040, 1
        %v1042 = vadd.f32 %v1040, %v1041
        %s1043 = vtos %v1042
        %s1044 = smul.f32 %s1043, 2.0
        %s1045 = sadd.f32 %s1021, %s1044
        %v1046 = vmul.f32 %v1002, %v1002
        %v1047 = vmul.f32 %v1003, %v1003
        %1050 = vrot.lane.b32.xlu0 %v1046, 127
        %v1051 = vpop.permute.xlu0 %1050
        %1052 = vrot.lane.b32.xlu0 %v1047, 127
        %v1053 = vpop.permute.xlu0 %1052
        %v1056 = vsel %vm619, %v1051, 0.0
        %v1057 = vsel %vm619, %v1053, 0.0
        %v1058 = vadd.f32 %v1056, %v1057
        %1059 = vadd.xlane.f32.xlu0 %v1058
        %v1060 = vpop.xlane.xlu0 %1059
        %v1061 = vrot.slane %v1060, 4
        %v1062 = vadd.f32 %v1060, %v1061
        %v1063 = vrot.slane %v1062, 2
        %v1064 = vadd.f32 %v1062, %v1063
        %v1065 = vrot.slane %v1064, 1
        %v1066 = vadd.f32 %v1064, %v1065
        %s1067 = vtos %v1066
        %s1068 = smul.f32 %s1067, 256.0
        %s1069 = sadd.f32 %s1045, %s1068
        %s1070 = smul.f32 %s631, 0.001
        %s1071 = smul.f32 %s665, 0.001
        %s1072 = sadd.f32 %s1070, %s1071
        %s1073 = smul.f32 %s1069, 5e-06
        %s1074 = sadd.f32 %s1072, %s1073
        %v1075 = vrcp.pop 2.0
        %v1076 = vmul.f32 2.0, %v1075
        %v1077 = vsub.f32 1.0, %v1076
        %v1078 = vmul.f32 %v1075, %v1077
        %v1079 = vadd.f32 %v1075, %v1078
        %vm1080 = vweird.f32 %v1075
        %v1081 = vsel %vm1080, %v1075, %v1079
        %s1082 = vtos %v1081
        %s1083 = smul.f32 %s1074, %s1082
        %v1084 = vstv %s1083
        %v1085 = vadd.f32 %v1084, 0.0
        %1086 = vst [vmem:[%s339] sm:$0x1] %v1085
        %s1087 = sand.u32 %s214, 1
        %s1088 = scalar_lea.sflag [#allocation3], %s1087
        %s1089 = sand.u32 %s214, 1
        %s1090 = scalar_lea.vmem [#allocation5], %s1089
        // Predicated region
        $region57: #{tpu_custom_call.1} parent=51 // pred_check
          %p1091 = pneg %p224
        $region58: #{tpu_custom_call.1} parent=51 // pred_check_branch
          %1093 = sbr.rel (%p1091) target = $region60
        $region59: #{tpu_custom_call.1} parent=51 // pred_region
          %1095 = vsyncadd %s1088, 0
          %s1096 = scalar_lea.hbm %s8, %s23
          %s1098 = sshll.u32 %s1090, 4
          %s1099 = int_to_ptr.vmem [resolvable:$true] %s1098
          %s1100 = sshll.u32 %s1096, 4
          %s1101 = int_to_ptr.hbm [resolvable:$true] %s1100
          %1103 = dma.vmem_to_hbm [thread:$0]  %s1099, 16, %s1101, %s1088
        $region60: #{tpu_custom_call.1} parent=51 // pred_fallthru
          _
      $region52: #{tpu_custom_call.1} parent=5 // pred_fallthru
        _
      %p1104 = scmp.le.s32.totalorder 2, %s18
      // Predicated region
      $region61: #{tpu_custom_call.1} parent=5 // pred_check
        %p1105 = pneg %p1104
      $region62: #{tpu_custom_call.1} parent=5 // pred_check_branch
        %1107 = sbr.rel (%p1105) target = $region64
      $region63: #{tpu_custom_call.1} parent=5 // pred_region
        %s1108 = ssub.s32 %s18, 2
        // Predicated region
        $region65: #{tpu_custom_call.1} parent=63 // pred_check
          %p1109 = pneg %p230
        $region66: #{tpu_custom_call.1} parent=63 // pred_check_branch
          %1111 = sbr.rel (%p1109) target = $region68
        $region67: #{tpu_custom_call.1} parent=63 // pred_region
          %s1112 = sand.u32 %s215, 1
          %s1113 = scalar_lea.sflag [#allocation3], %s1112
          %s1114 = sand.u32 %s215, 1
          %s1115 = scalar_lea.vmem [#allocation5], %s1114
          %1117 = dma.done %s1113, 16
        $region68: #{tpu_custom_call.1} parent=63 // pred_fallthru
          _
      $region64: #{tpu_custom_call.1} parent=5 // pred_fallthru
        _
    $region6: #{tpu_custom_call.1} parent=1 // loop_footer
      %s22 = sadd.s32 1, %s18
    $region7: #{tpu_custom_call.1} parent=1 // loop_footer_branch
      %17 = sbr.rel target = $region3
    $region8: #{tpu_custom_call.1} parent=1 // loop_exit
      _
    %1118 = vsyncpa [#allocation3], 1
    %s1119 = scalar_lea.sflag [#allocation3], 1
    %1120 = vsyncpa %s1119, 1
    %1121 = vsyncpa [#allocation4], 1
    %s1122 = scalar_lea.sflag [#allocation4], 1
    %1123 = vsyncpa %s1122, 1

</llo_original>
